<compile_context>
chip_gen: v7x
topology: tpu7x:2x2x1
jax: 0.10.0
libtpu: 0.0.40
codegen_flags: <defaults>
</compile_context>

<pallas_src>
import functools

import jax
import jax.numpy as jnp
import numpy as np
from jax import lax
from jax.experimental import pallas as pl
from jax.experimental.pallas import tpu as pltpu


def _vmem_budget_bytes():
    """Generation-aware VMEM budget (v5e/v6e: 128 MiB, v7x: 64 MiB physical)."""
    cap = 64 * 1024 * 1024  # conservative fallback = v7x physical
    try:
        cap = int(getattr(pltpu.get_tpu_info(), "vmem_capacity_bytes", cap))
    except Exception:
        pass
    return int(min(cap * 3 // 4, 112 * 1024 * 1024))


# --------------------------------------------------------------------------
# Stage 1: parallel FFN residual + W_in projection over all (seq*batch) rows.
# --------------------------------------------------------------------------
def _ffn_proj_kernel(x_ref,                      # (R, D) f32
                     w1t_ref, b1_ref,            # (D, H) bf16, (1, H) f32
                     w2t_ref, b2_ref,            # (H, D) bf16, (1, D) f32
                     wint_ref, bint_ref,         # (D, M) f32,  (1, M) f32
                     out_ref,                    # (R, D)
                     xproj_ref):                 # (R, M) f32
    x = x_ref[...]                               # f32
    # FFN branch in bf16 (f32 accumulation): purely continuous output.
    xb = x.astype(w1t_ref.dtype)
    h = jnp.dot(xb, w1t_ref[...], preferred_element_type=jnp.float32) + b1_ref[...]
    h = jnp.maximum(h, 0.0)
    ffn = jnp.dot(h.astype(w2t_ref.dtype), w2t_ref[...],
                  preferred_element_type=jnp.float32) + b2_ref[...]
    # TODO(synk): if production d_model stays < 128, write the residual through
    # a lane-dense reshaped slab instead of a D-wide (masked-store) output.
    out_ref[...] = (x + ffn).astype(out_ref.dtype)
    # W_in projection kept f32: it feeds the top-k threshold decision.
    # TODO(synk): bf16x3 precision would roughly halve this dot if exact tie
    # handling near the threshold is not required at production scale.
    xproj_ref[...] = (jnp.dot(x, wint_ref[...], preferred_element_type=jnp.float32)
                      + bint_ref[...])


# --------------------------------------------------------------------------
# Stage 2: sequential state recurrence + LRU memory update.
# --------------------------------------------------------------------------
def _recurrence_kernel(gamma_ref,                # SMEM (1, 1) f32
                       xproj_ref,                # VMEM (t_blk, Bc, M) f32
                       wstt_ref,                 # VMEM (M, M) f32 == W_state.T
                       mem_ref,                  # (Bc, M) f32 output (resident)
                       state_scr,                # VMEM (Bc, M) f32
                       mem_scr,                  # VMEM (Bc, M) f32
                       *, top_k, t_blk):
    s = pl.program_id(1)                         # sequential time-block axis

    @pl.when(s == 0)
    def _init():
        state_scr[...] = jnp.zeros_like(state_scr)
        mem_scr[...] = jnp.zeros_like(mem_scr)

    gamma = gamma_ref[0, 0]
    wstt = wstt_ref[...]
    kf = jnp.float32(top_k)
    neg_inf = jnp.float32(-jnp.inf)

    def topk_threshold(su):
        # torch.topk threshold semantics (k-th largest counting multiplicity;
        # ties at the threshold kept).  Peel one distinct maximum per pass.
        # Serial chain: max -> mask -> remaining -> max.  The count reduction
        # and the threshold select depend only on (su, m) and sit OFF the
        # chain, so they overlap with the next max-peel.
        rows = su.shape[0]

        def body(_, carry):
            remaining, thr = carry                                    # (rows,M),(rows,1)
            m = jnp.max(remaining, axis=-1, keepdims=True)            # chain (XLU)
            mask = su >= m                                            # reused below
            remaining = jnp.where(mask, neg_inf, su)                  # chain (VPU)
            cnt = jnp.sum(mask.astype(jnp.float32), axis=-1,
                          keepdims=True)                              # off-chain
            thr = jnp.maximum(thr, jnp.where(cnt >= kf, m, neg_inf))  # off-chain
            return remaining, thr

        thr0 = jnp.full((rows, 1), neg_inf, jnp.float32)
        _, thr = lax.fori_loop(0, top_k, body, (su, thr0), unroll=True)
        return thr

    def step(i, carry):
        state, mem = carry                                            # (Bc,M) f32
        su = (jnp.dot(state, wstt, preferred_element_type=jnp.float32)
              + xproj_ref[i])
        su = jnp.maximum(su, 0.0)
        thr = topk_threshold(su)
        su = jnp.where(su >= thr, su, 0.0)
        mem = gamma * mem + (1.0 - gamma) * su
        return su, mem

    state_f, mem_f = lax.fori_loop(0, t_blk, step,
                                   (state_scr[...], mem_scr[...]))
    state_scr[...] = state_f
    mem_scr[...] = mem_f

    # Single lane-dense writeback of the f32 accumulator on the final block.
    @pl.when(s == pl.num_programs(1) - 1)
    def _finalize():
        mem_ref[...] = mem_f.astype(mem_ref.dtype)


# --------------------------------------------------------------------------
# Parameter prep (once, outside the per-call jit): transpose + cast weights.
# --------------------------------------------------------------------------
def prepare_params(params):
    w1, b1, w2, b2, win, binp, wstate, gamma = params
    return dict(
        w1t=jnp.asarray(w1, jnp.float32).T.astype(jnp.bfloat16),
        b1=jnp.asarray(b1, jnp.float32).reshape(1, -1),
        w2t=jnp.asarray(w2, jnp.float32).T.astype(jnp.bfloat16),
        b2=jnp.asarray(b2, jnp.float32).reshape(1, -1),
        wint=jnp.asarray(win, jnp.float32).T,
        binp=jnp.asarray(binp, jnp.float32).reshape(1, -1),
        # TODO(synk): at production M on v7x, pre-cast W_state to bf16 and/or
        # stream K-chunks from HBM instead of holding a full f32 (M, M) block.
        wstt=jnp.asarray(wstate, jnp.float32).T,
        gamma=jnp.asarray(gamma, jnp.float32).reshape(1, 1),
    )


# --------------------------------------------------------------------------
# Wrapper
# --------------------------------------------------------------------------
@functools.partial(jax.jit, static_argnames=("top_k",))
def ssma_forward(x, prepped, *, top_k):
    """x: (B, S, D) float32.  Returns (outputs (B, S, D), memory (B, M) f32)."""
    w1t, b1 = prepped["w1t"], prepped["b1"]
    w2t, b2 = prepped["w2t"], prepped["b2"]
    wint, binp = prepped["wint"], prepped["binp"]
    wstt, gamma2d = prepped["wstt"], prepped["gamma"]

    B, S, D = x.shape
    H = w1t.shape[1]
    M = wint.shape[1]
    itemsize = jnp.dtype(x.dtype).itemsize

    vmem_budget = _vmem_budget_bytes()

    # Seq-major layout so the recurrent grid walks contiguous (B, M) tiles.
    x2d = jnp.transpose(x, (1, 0, 2)).reshape(S * B, D)
    n_rows = S * B

    # ----- stage 1: parallel FFN residual + W_in projection ---------------
    weight_bytes = D * H * 2 + H * 4 + H * D * 2 + D * 4 + D * M * 4 + M * 4
    per_row = 2 * (D * 4 + D * itemsize + M * 4)     # dbl-buffered x/out/xproj
    avail = max(vmem_budget - weight_bytes, 8 * per_row)
    row_cap = max(8, min(1024, (avail // per_row) // 8 * 8))
    row_blk = n_rows if n_rows <= row_cap else row_cap

    cost = pl.CostEstimate(
        flops=n_rows * (4 * D * H + 2 * D * M),
        transcendentals=0,
        bytes_accessed=n_rows * (D * 4 + D * itemsize + M * 4) + weight_bytes)

    out2d, xproj2d = pl.pallas_call(
        _ffn_proj_kernel,
        out_shape=(jax.ShapeDtypeStruct((n_rows, D), x.dtype),
                   jax.ShapeDtypeStruct((n_rows, M), jnp.float32)),
        grid_spec=pltpu.PrefetchScalarGridSpec(
            num_scalar_prefetch=0,
            grid=(pl.cdiv(n_rows, row_blk),),
            in_specs=[
                pl.BlockSpec((row_blk, D), lambda r: (r, 0)),          # x rows
                # Constant-index blocks: single-buffer (halves weight VMEM).
                pl.BlockSpec((D, H), lambda r: (0, 0), pipeline_mode=pl.Buffered(1)),
                pl.BlockSpec((1, H), lambda r: (0, 0), pipeline_mode=pl.Buffered(1)),
                pl.BlockSpec((H, D), lambda r: (0, 0), pipeline_mode=pl.Buffered(1)),
                pl.BlockSpec((1, D), lambda r: (0, 0), pipeline_mode=pl.Buffered(1)),
                pl.BlockSpec((D, M), lambda r: (0, 0), pipeline_mode=pl.Buffered(1)),
                pl.BlockSpec((1, M), lambda r: (0, 0), pipeline_mode=pl.Buffered(1)),
            ],
            out_specs=[
                pl.BlockSpec((row_blk, D), lambda r: (r, 0)),          # x + ffn
                pl.BlockSpec((row_blk, M), lambda r: (r, 0)),          # x_proj
            ],
        ),
        compiler_params=pltpu.CompilerParams(
            dimension_semantics=("parallel",),
            vmem_limit_bytes=vmem_budget),
        cost_estimate=cost,
    )(x2d, w1t, b1, w2t, b2, wint, binp)

    # ----- stage 2: sequential recurrence over (batch-chunk, time-block) --
    # Pad batch to a multiple of 8 sublanes (padded rows stay 0, sliced off).
    B_pad = ((B + 7) // 8) * 8
    xproj_sbm = xproj2d.reshape(S, B, M)
    if B_pad != B:
        xproj_sbm = jnp.pad(xproj_sbm, ((0, 0), (0, B_pad - B), (0, 0)))

    # Leading batch-chunk axis is "parallel" so v7x can run independent batch
    # slices of the recurrence on its two TensorCores; only split once each
    # chunk still feeds the MXU well (no benefit on single-TC v5e/v6e).
    n_bchunks = 2 if (B_pad >= 64 and B_pad % 16 == 0) else 1
    b_chunk = B_pad // n_bchunks

    wstate_bytes = M * M * 4                                  # single-buffered
    resident_bytes = 2 * b_chunk * M * 4 + 2 * b_chunk * M * 4  # scratch + out
    t_cap = max(1, (vmem_budget - wstate_bytes - resident_bytes)
                // (2 * b_chunk * M * 4))
    t_cap = min(t_cap, 128, S)
    t_blk = max(c for c in range(1, t_cap + 1) if S % c == 0)

    mem_pad = pl.pallas_call(
        functools.partial(_recurrence_kernel, top_k=top_k, t_blk=t_blk),
        out_shape=jax.ShapeDtypeStruct((B_pad, M), jnp.float32),
        grid_spec=pltpu.PrefetchScalarGridSpec(
            num_scalar_prefetch=0,
            grid=(n_bchunks, S // t_blk),
            in_specs=[
                pl.BlockSpec(memory_space=pltpu.MemorySpace.SMEM),        # gamma
                pl.BlockSpec((t_blk, b_chunk, M), lambda b, s: (s, b, 0)),  # x_proj
                pl.BlockSpec((M, M), lambda b, s: (0, 0),
                             pipeline_mode=pl.Buffered(1)),               # W_state^T
            ],
            out_specs=pl.BlockSpec((b_chunk, M), lambda b, s: (b, 0)),    # memory
            scratch_shapes=[pltpu.VMEM((b_chunk, M), jnp.float32),        # state
                            pltpu.VMEM((b_chunk, M), jnp.float32)],       # mem acc
        ),
        compiler_params=pltpu.CompilerParams(
            dimension_semantics=("parallel", "arbitrary"),
            vmem_limit_bytes=vmem_budget),
    )(gamma2d, xproj_sbm, wstt)

    outputs = jnp.transpose(out2d.reshape(S, B, D), (1, 0, 2))
    return outputs, mem_pad[:B]


# --------------------------------------------------------------------------
# Pure-JAX replica of the PyTorch forward (state=None path) for verification.
# --------------------------------------------------------------------------
def ssma_reference(x, params, top_k):
    w1, b1, w2, b2, win, binp, wstate, gamma = params
    B, S, D = x.shape
    M = win.shape[0]
    dot = functools.partial(jnp.dot, precision=jax.lax.Precision.HIGHEST)
    state = jnp.zeros((B, M), jnp.float32)
    memory = state
    outs = []
    for t in range(S):
        xt = x[:, t, :]
        h = jax.nn.relu(dot(xt, w1.T) + b1)
        ffn = dot(h, w2.T) + b2
        x_proj = dot(xt, win.T) + binp
        su = jax.nn.relu(dot(state, wstate.T) + x_proj)
        thr = jax.lax.top_k(su, top_k)[0][:, -1:]
        su = su * (su >= thr).astype(su.dtype)
        memory = gamma * memory + (1.0 - gamma) * su
        state = su
        outs.append(xt + ffn)
    return jnp.stack(outs, axis=1), memory


if __name__ == "__main__":
    B, S, D = 2, 8, 32            # batch, seq_len, d_model
    M, TOP_K = 256, 32            # memory size, sparsity
    H = 4 * D                     # ffn hidden

    key = jax.random.PRNGKey(0)
    ks = jax.random.split(key, 8)
    x = jax.random.normal(ks[0], (B, S, D), jnp.float32)
    w1 = 0.05 * jax.random.normal(ks[1], (H, D), jnp.float32)      # ffn[0].weight
    b1 = 0.05 * jax.random.normal(ks[2], (H,), jnp.float32)        # ffn[0].bias
    w2 = 0.05 * jax.random.normal(ks[3], (D, H), jnp.float32)      # ffn[2].weight
    b2 = 0.05 * jax.random.normal(ks[4], (D,), jnp.float32)        # ffn[2].bias
    win = 0.05 * jax.random.normal(ks[5], (M, D), jnp.float32)     # W_in.weight
    binp = 0.05 * jax.random.normal(ks[6], (M,), jnp.float32)      # W_in.bias
    wstate = 0.05 * jax.random.normal(ks[7], (M, M), jnp.float32)  # W_state.weight
    gamma = jnp.float32(0.9)
    params = (w1, b1, w2, b2, win, binp, wstate, gamma)

    prepped = prepare_params(params)          # one-time transpose / cast
    outs, mem = ssma_forward(x, prepped, top_k=TOP_K)
    jax.block_until_ready((outs, mem))

    ref_outs, ref_mem = ssma_reference(x, params, TOP_K)
    np.testing.assert_allclose(np.asarray(outs), np.asarray(ref_outs),
                               atol=1e-2, rtol=1e-2)
    np.testing.assert_allclose(np.asarray(mem), np.asarray(ref_mem),
                               atol=1e-2, rtol=1e-2)
    print("KERNEL_OK")
</pallas_src>

<mosaic_0001>
module attributes {stable_mosaic.version = 11 : i64} {
  func.func @_ffn_proj_kernel(%arg0: i32, %arg1: memref<16x32xf32, #tpu.memory_space<vmem>>, %arg2: memref<32x128xbf16, #tpu.memory_space<vmem>>, %arg3: memref<1x128xf32, #tpu.memory_space<vmem>>, %arg4: memref<128x32xbf16, #tpu.memory_space<vmem>>, %arg5: memref<1x32xf32, #tpu.memory_space<vmem>>, %arg6: memref<32x256xf32, #tpu.memory_space<vmem>>, %arg7: memref<1x256xf32, #tpu.memory_space<vmem>>, %arg8: memref<16x32xf32, #tpu.memory_space<vmem>>, %arg9: memref<16x256xf32, #tpu.memory_space<vmem>>) attributes {dimension_semantics = [#tpu.dimension_semantics<parallel>], iteration_bounds = array<i64: 1>, scalar_prefetch = 0 : i64, scratch_operands = 0 : i64, tpu.core_type = #tpu.core_type<tc>, window_params = [{transform_indices = @transform_0, window_bounds = array<i64: 16, 32>}, {pipeline_mode = #tpu.pipeline_mode<synchronous>, transform_indices = @transform_1, window_bounds = array<i64: 32, 128>}, {pipeline_mode = #tpu.pipeline_mode<synchronous>, transform_indices = @transform_2, window_bounds = array<i64: 1, 128>}, {pipeline_mode = #tpu.pipeline_mode<synchronous>, transform_indices = @transform_3, window_bounds = array<i64: 128, 32>}, {pipeline_mode = #tpu.pipeline_mode<synchronous>, transform_indices = @transform_4, window_bounds = array<i64: 1, 32>}, {pipeline_mode = #tpu.pipeline_mode<synchronous>, transform_indices = @transform_5, window_bounds = array<i64: 32, 256>}, {pipeline_mode = #tpu.pipeline_mode<synchronous>, transform_indices = @transform_6, window_bounds = array<i64: 1, 256>}, {transform_indices = @transform_7, window_bounds = array<i64: 16, 32>}, {transform_indices = @transform_8, window_bounds = array<i64: 16, 256>}]} {
    %c0 = arith.constant 0 : index
    %c0_0 = arith.constant 0 : index
    %0 = vector.load %arg1[%c0, %c0_0] : memref<16x32xf32, #tpu.memory_space<vmem>>, vector<16x32xf32>
    %1 = arith.truncf %0 : vector<16x32xf32> to vector<16x32xbf16>
    %c0_1 = arith.constant 0 : index
    %c0_2 = arith.constant 0 : index
    %2 = vector.load %arg2[%c0_1, %c0_2] : memref<32x128xbf16, #tpu.memory_space<vmem>>, vector<32x128xbf16>
    %cst = arith.constant dense<0.000000e+00> : vector<16x128xf32>
    %3 = tpu.matmul %1, %2, %cst {dimension_numbers = #tpu.dot_dimension_numbers<[1], [0], [0], [1], [0, 0, 1, 1], [], []>} : vector<16x32xbf16>, vector<32x128xbf16>, vector<16x128xf32> -> vector<16x128xf32>
    %c0_3 = arith.constant 0 : index
    %c0_4 = arith.constant 0 : index
    %4 = vector.load %arg3[%c0_3, %c0_4] : memref<1x128xf32, #tpu.memory_space<vmem>>, vector<1x128xf32>
    %5 = vector.broadcast %4 : vector<1x128xf32> to vector<16x128xf32>
    %6 = arith.addf %3, %5 : vector<16x128xf32>
    %cst_5 = arith.constant 0.000000e+00 : f32
    %7 = vector.broadcast %cst_5 : f32 to vector<16x128xf32>
    %8 = arith.maximumf %6, %7 : vector<16x128xf32>
    %9 = arith.truncf %8 : vector<16x128xf32> to vector<16x128xbf16>
    %c0_6 = arith.constant 0 : index
    %c0_7 = arith.constant 0 : index
    %10 = vector.load %arg4[%c0_6, %c0_7] : memref<128x32xbf16, #tpu.memory_space<vmem>>, vector<128x32xbf16>
    %cst_8 = arith.constant dense<0.000000e+00> : vector<16x32xf32>
    %11 = tpu.matmul %9, %10, %cst_8 {dimension_numbers = #tpu.dot_dimension_numbers<[1], [0], [0], [1], [0, 0, 1, 1], [], []>} : vector<16x128xbf16>, vector<128x32xbf16>, vector<16x32xf32> -> vector<16x32xf32>
    %c0_9 = arith.constant 0 : index
    %c0_10 = arith.constant 0 : index
    %12 = vector.load %arg5[%c0_9, %c0_10] : memref<1x32xf32, #tpu.memory_space<vmem>>, vector<1x32xf32>
    %13 = vector.broadcast %12 : vector<1x32xf32> to vector<16x32xf32>
    %14 = arith.addf %11, %13 : vector<16x32xf32>
    %15 = arith.addf %0, %14 : vector<16x32xf32>
    %c0_11 = arith.constant 0 : index
    %c0_12 = arith.constant 0 : index
    %16 = vector.load %arg8[%c0_11, %c0_12] : memref<16x32xf32, #tpu.memory_space<vmem>>, vector<16x32xf32>
    tpu.vector_store %arg8[%c0_11, %c0_12], %15 {strides = array<i32>} : memref<16x32xf32, #tpu.memory_space<vmem>>, vector<16x32xf32>,
    %c0_13 = arith.constant 0 : index
    %c0_14 = arith.constant 0 : index
    %17 = vector.load %arg6[%c0_13, %c0_14] : memref<32x256xf32, #tpu.memory_space<vmem>>, vector<32x256xf32>
    %cst_15 = arith.constant dense<0.000000e+00> : vector<16x256xf32>
    %18 = tpu.matmul %0, %17, %cst_15 {dimension_numbers = #tpu.dot_dimension_numbers<[1], [0], [0], [1], [0, 0, 1, 1], [], []>} : vector<16x32xf32>, vector<32x256xf32>, vector<16x256xf32> -> vector<16x256xf32>
    %c0_16 = arith.constant 0 : index
    %c0_17 = arith.constant 0 : index
    %19 = vector.load %arg7[%c0_16, %c0_17] : memref<1x256xf32, #tpu.memory_space<vmem>>, vector<1x256xf32>
    %20 = vector.broadcast %19 : vector<1x256xf32> to vector<16x256xf32>
    %21 = arith.addf %18, %20 : vector<16x256xf32>
    %c0_18 = arith.constant 0 : index
    %c0_19 = arith.constant 0 : index
    %22 = vector.load %arg9[%c0_18, %c0_19] : memref<16x256xf32, #tpu.memory_space<vmem>>, vector<16x256xf32>
    tpu.vector_store %arg9[%c0_18, %c0_19], %21 {strides = array<i32>} : memref<16x256xf32, #tpu.memory_space<vmem>>, vector<16x256xf32>,
    return
  }
  func.func @transform_0(%arg0: i32) -> (i32, i32) {
    %c0_i32 = arith.constant 0 : i32
    %c0_i32_0 = arith.constant 0 : i32
    return %arg0, %c0_i32 : i32, i32
  }
  func.func @transform_1(%arg0: i32) -> (i32, i32) {
    %c0_i32 = arith.constant 0 : i32
    %c0_i32_0 = arith.constant 0 : i32
    %c0_i32_1 = arith.constant 0 : i32
    return %c0_i32, %c0_i32_0 : i32, i32
  }
  func.func @transform_2(%arg0: i32) -> (i32, i32) {
    %c0_i32 = arith.constant 0 : i32
    %c0_i32_0 = arith.constant 0 : i32
    %c0_i32_1 = arith.constant 0 : i32
    return %c0_i32, %c0_i32_0 : i32, i32
  }
  func.func @transform_3(%arg0: i32) -> (i32, i32) {
    %c0_i32 = arith.constant 0 : i32
    %c0_i32_0 = arith.constant 0 : i32
    %c0_i32_1 = arith.constant 0 : i32
    return %c0_i32, %c0_i32_0 : i32, i32
  }
  func.func @transform_4(%arg0: i32) -> (i32, i32) {
    %c0_i32 = arith.constant 0 : i32
    %c0_i32_0 = arith.constant 0 : i32
    %c0_i32_1 = arith.constant 0 : i32
    return %c0_i32, %c0_i32_0 : i32, i32
  }
  func.func @transform_5(%arg0: i32) -> (i32, i32) {
    %c0_i32 = arith.constant 0 : i32
    %c0_i32_0 = arith.constant 0 : i32
    %c0_i32_1 = arith.constant 0 : i32
    return %c0_i32, %c0_i32_0 : i32, i32
  }
  func.func @transform_6(%arg0: i32) -> (i32, i32) {
    %c0_i32 = arith.constant 0 : i32
    %c0_i32_0 = arith.constant 0 : i32
    %c0_i32_1 = arith.constant 0 : i32
    return %c0_i32, %c0_i32_0 : i32, i32
  }
  func.func @transform_7(%arg0: i32) -> (i32, i32) {
    %c0_i32 = arith.constant 0 : i32
    %c0_i32_0 = arith.constant 0 : i32
    return %arg0, %c0_i32 : i32, i32
  }
  func.func @transform_8(%arg0: i32) -> (i32, i32) {
    %c0_i32 = arith.constant 0 : i32
    %c0_i32_0 = arith.constant 0 : i32
    return %arg0, %c0_i32 : i32, i32
  }
}

module attributes {stable_mosaic.version = 11 : i64} {
  func.func @_recurrence_kernel(%arg0: i32, %arg1: i32, %arg2: memref<1x1xf32, #tpu.memory_space<smem>>, %arg3: memref<8x8x256xf32, #tpu.memory_space<vmem>>, %arg4: memref<256x256xf32, #tpu.memory_space<vmem>>, %arg5: memref<8x256xf32, #tpu.memory_space<vmem>>, %arg6: memref<8x256xf32, #tpu.memory_space<vmem>>, %arg7: memref<8x256xf32, #tpu.memory_space<vmem>>) attributes {dimension_semantics = [#tpu.dimension_semantics<parallel>, #tpu.dimension_semantics<arbitrary>], iteration_bounds = array<i64: 1, 1>, scalar_prefetch = 0 : i64, scratch_operands = 2 : i64, tpu.core_type = #tpu.core_type<tc>, window_params = [{transform_indices = @transform_0, window_bounds = array<i64: 1, 1>}, {transform_indices = @transform_1, window_bounds = array<i64: 8, 8, 256>}, {pipeline_mode = #tpu.pipeline_mode<synchronous>, transform_indices = @transform_2, window_bounds = array<i64: 256, 256>}, {transform_indices = @transform_3, window_bounds = array<i64: 8, 256>}]} {
    %c0_i32 = arith.constant 0 : i32
    %0 = arith.cmpi eq, %arg1, %c0_i32 : i32
    %1 = arith.extui %0 : i1 to i32
    %c0_i32_0 = arith.constant 0 : i32
    %2 = arith.cmpi ne, %1, %c0_i32_0 : i32
    scf.if %2 {
      %cst_17 = arith.constant 0.000000e+00 : f32
      %14 = vector.broadcast %cst_17 : f32 to vector<8x256xf32>
      %c0_18 = arith.constant 0 : index
      %c0_19 = arith.constant 0 : index
      %15 = vector.load %arg6[%c0_18, %c0_19] : memref<8x256xf32, #tpu.memory_space<vmem>>, vector<8x256xf32>
      tpu.vector_store %arg6[%c0_18, %c0_19], %14 {strides = array<i32>} : memref<8x256xf32, #tpu.memory_space<vmem>>, vector<8x256xf32>,
      %cst_20 = arith.constant 0.000000e+00 : f32
      %16 = vector.broadcast %cst_20 : f32 to vector<8x256xf32>
      %c0_21 = arith.constant 0 : index
      %c0_22 = arith.constant 0 : index
      %17 = vector.load %arg7[%c0_21, %c0_22] : memref<8x256xf32, #tpu.memory_space<vmem>>, vector<8x256xf32>
      tpu.vector_store %arg7[%c0_21, %c0_22], %16 {strides = array<i32>} : memref<8x256xf32, #tpu.memory_space<vmem>>, vector<8x256xf32>,
    } else {
    }
    %c0 = arith.constant 0 : index
    %c0_1 = arith.constant 0 : index
    %3 = memref.load %arg2[%c0, %c0_1] : memref<1x1xf32, #tpu.memory_space<smem>>
    %c0_2 = arith.constant 0 : index
    %c0_3 = arith.constant 0 : index
    %4 = vector.load %arg4[%c0_2, %c0_3] : memref<256x256xf32, #tpu.memory_space<vmem>>, vector<256x256xf32>
    %c0_4 = arith.constant 0 : index
    %c0_5 = arith.constant 0 : index
    %5 = vector.load %arg6[%c0_4, %c0_5] : memref<8x256xf32, #tpu.memory_space<vmem>>, vector<8x256xf32>
    %c0_6 = arith.constant 0 : index
    %c0_7 = arith.constant 0 : index
    %6 = vector.load %arg7[%c0_6, %c0_7] : memref<8x256xf32, #tpu.memory_space<vmem>>, vector<8x256xf32>
    %cst = arith.constant 0xFF800000 : f32
    %cst_8 = arith.constant 3.200000e+01 : f32
    %c0_i32_9 = arith.constant 0 : i32
    %c8_i32 = arith.constant 8 : i32
    %7 = arith.addi %c0_i32_9, %c8_i32 : i32
    %c1_i32 = arith.constant 1 : i32
    %8:2 = scf.for %arg8 = %c0_i32_9 to %7 step %c1_i32 iter_args(%arg9 = %5, %arg10 = %6) -> (vector<8x256xf32>, vector<8x256xf32>)  : i32 {
      %cst_17 = arith.constant dense<0.000000e+00> : vector<8x256xf32>
      %14 = tpu.matmul %arg9, %4, %cst_17 {dimension_numbers = #tpu.dot_dimension_numbers<[1], [0], [0], [1], [0, 0, 1, 1], [], []>} : vector<8x256xf32>, vector<256x256xf32>, vector<8x256xf32> -> vector<8x256xf32>
      %15 = arith.index_cast %arg8 : i32 to index
      %c0_18 = arith.constant 0 : index
      %c0_19 = arith.constant 0 : index
      %16 = vector.load %arg3[%15, %c0_18, %c0_19] : memref<8x8x256xf32, #tpu.memory_space<vmem>>, vector<1x8x256xf32>
      %17 = vector.shape_cast %16 : vector<1x8x256xf32> to vector<8x256xf32>
      %18 = arith.addf %14, %17 : vector<8x256xf32>
      %cst_20 = arith.constant 0.000000e+00 : f32
      %19 = vector.broadcast %cst_20 : f32 to vector<8x256xf32>
      %20 = arith.maximumf %18, %19 : vector<8x256xf32>
      %21 = vector.broadcast %cst : f32 to vector<8x1xf32>
      %c0_i32_21 = arith.constant 0 : i32
      %cst_22 = arith.constant dense<0xFF800000> : vector<8xf32>
      %22 = vector.multi_reduction <maximumf>, %20, %cst_22 [1] : vector<8x256xf32> to vector<8xf32>
      %23 = vector.shape_cast %22 : vector<8xf32> to vector<8x1xf32>
      %24 = vector.broadcast %23 : vector<8x1xf32> to vector<8x256xf32>
      %25 = arith.cmpf oge, %20, %24 : vector<8x256xf32>
      %26 = vector.broadcast %cst : f32 to vector<8x256xf32>
      %27 = arith.select %25, %26, %20 : vector<8x256xi1>, vector<8x256xf32>
      %28 = arith.extui %25 : vector<8x256xi1> to vector<8x256xi32>
      %29 = arith.sitofp %28 : vector<8x256xi32> to vector<8x256xf32>
      %cst_23 = arith.constant dense<0.000000e+00> : vector<8xf32>
      %30 = vector.multi_reduction <add>, %29, %cst_23 [1] : vector<8x256xf32> to vector<8xf32>
      %31 = vector.shape_cast %30 : vector<8xf32> to vector<8x1xf32>
      %32 = vector.broadcast %cst_8 : f32 to vector<8x1xf32>
      %33 = arith.cmpf oge, %31, %32 : vector<8x1xf32>
      %34 = vector.broadcast %cst : f32 to vector<8x1xf32>
      %35 = arith.select %33, %23, %34 : vector<8x1xi1>, vector<8x1xf32>
      %36 = arith.maximumf %21, %35 : vector<8x1xf32>
      %c1_i32_24 = arith.constant 1 : i32
      %cst_25 = arith.constant dense<0xFF800000> : vector<8xf32>
      %37 = vector.multi_reduction <maximumf>, %27, %cst_25 [1] : vector<8x256xf32> to vector<8xf32>
      %38 = vector.shape_cast %37 : vector<8xf32> to vector<8x1xf32>
      %39 = vector.broadcast %38 : vector<8x1xf32> to vector<8x256xf32>
      %40 = arith.cmpf oge, %20, %39 : vector<8x256xf32>
      %41 = vector.broadcast %cst : f32 to vector<8x256xf32>
      %42 = arith.select %40, %41, %20 : vector<8x256xi1>, vector<8x256xf32>
      %43 = arith.extui %40 : vector<8x256xi1> to vector<8x256xi32>
      %44 = arith.sitofp %43 : vector<8x256xi32> to vector<8x256xf32>
      %cst_26 = arith.constant dense<0.000000e+00> : vector<8xf32>
      %45 = vector.multi_reduction <add>, %44, %cst_26 [1] : vector<8x256xf32> to vector<8xf32>
      %46 = vector.shape_cast %45 : vector<8xf32> to vector<8x1xf32>
      %47 = vector.broadcast %cst_8 : f32 to vector<8x1xf32>
      %48 = arith.cmpf oge, %46, %47 : vector<8x1xf32>
      %49 = vector.broadcast %cst : f32 to vector<8x1xf32>
      %50 = arith.select %48, %38, %49 : vector<8x1xi1>, vector<8x1xf32>
      %51 = arith.maximumf %36, %50 : vector<8x1xf32>
      %c2_i32 = arith.constant 2 : i32
      %cst_27 = arith.constant dense<0xFF800000> : vector<8xf32>
      %52 = vector.multi_reduction <maximumf>, %42, %cst_27 [1] : vector<8x256xf32> to vector<8xf32>
      %53 = vector.shape_cast %52 : vector<8xf32> to vector<8x1xf32>
      %54 = vector.broadcast %53 : vector<8x1xf32> to vector<8x256xf32>
      %55 = arith.cmpf oge, %20, %54 : vector<8x256xf32>
      %56 = vector.broadcast %cst : f32 to vector<8x256xf32>
      %57 = arith.select %55, %56, %20 : vector<8x256xi1>, vector<8x256xf32>
      %58 = arith.extui %55 : vector<8x256xi1> to vector<8x256xi32>
      %59 = arith.sitofp %58 : vector<8x256xi32> to vector<8x256xf32>
      %cst_28 = arith.constant dense<0.000000e+00> : vector<8xf32>
      %60 = vector.multi_reduction <add>, %59, %cst_28 [1] : vector<8x256xf32> to vector<8xf32>
      %61 = vector.shape_cast %60 : vector<8xf32> to vector<8x1xf32>
      %62 = vector.broadcast %cst_8 : f32 to vector<8x1xf32>
      %63 = arith.cmpf oge, %61, %62 : vector<8x1xf32>
      %64 = vector.broadcast %cst : f32 to vector<8x1xf32>
      %65 = arith.select %63, %53, %64 : vector<8x1xi1>, vector<8x1xf32>
      %66 = arith.maximumf %51, %65 : vector<8x1xf32>
      %c3_i32 = arith.constant 3 : i32
      %cst_29 = arith.constant dense<0xFF800000> : vector<8xf32>
      %67 = vector.multi_reduction <maximumf>, %57, %cst_29 [1] : vector<8x256xf32> to vector<8xf32>
      %68 = vector.shape_cast %67 : vector<8xf32> to vector<8x1xf32>
      %69 = vector.broadcast %68 : vector<8x1xf32> to vector<8x256xf32>
      %70 = arith.cmpf oge, %20, %69 : vector<8x256xf32>
      %71 = vector.broadcast %cst : f32 to vector<8x256xf32>
      %72 = arith.select %70, %71, %20 : vector<8x256xi1>, vector<8x256xf32>
      %73 = arith.extui %70 : vector<8x256xi1> to vector<8x256xi32>
      %74 = arith.sitofp %73 : vector<8x256xi32> to vector<8x256xf32>
      %cst_30 = arith.constant dense<0.000000e+00> : vector<8xf32>
      %75 = vector.multi_reduction <add>, %74, %cst_30 [1] : vector<8x256xf32> to vector<8xf32>
      %76 = vector.shape_cast %75 : vector<8xf32> to vector<8x1xf32>
      %77 = vector.broadcast %cst_8 : f32 to vector<8x1xf32>
      %78 = arith.cmpf oge, %76, %77 : vector<8x1xf32>
      %79 = vector.broadcast %cst : f32 to vector<8x1xf32>
      %80 = arith.select %78, %68, %79 : vector<8x1xi1>, vector<8x1xf32>
      %81 = arith.maximumf %66, %80 : vector<8x1xf32>
      %c4_i32 = arith.constant 4 : i32
      %cst_31 = arith.constant dense<0xFF800000> : vector<8xf32>
      %82 = vector.multi_reduction <maximumf>, %72, %cst_31 [1] : vector<8x256xf32> to vector<8xf32>
      %83 = vector.shape_cast %82 : vector<8xf32> to vector<8x1xf32>
      %84 = vector.broadcast %83 : vector<8x1xf32> to vector<8x256xf32>
      %85 = arith.cmpf oge, %20, %84 : vector<8x256xf32>
      %86 = vector.broadcast %cst : f32 to vector<8x256xf32>
      %87 = arith.select %85, %86, %20 : vector<8x256xi1>, vector<8x256xf32>
      %88 = arith.extui %85 : vector<8x256xi1> to vector<8x256xi32>
      %89 = arith.sitofp %88 : vector<8x256xi32> to vector<8x256xf32>
      %cst_32 = arith.constant dense<0.000000e+00> : vector<8xf32>
      %90 = vector.multi_reduction <add>, %89, %cst_32 [1] : vector<8x256xf32> to vector<8xf32>
      %91 = vector.shape_cast %90 : vector<8xf32> to vector<8x1xf32>
      %92 = vector.broadcast %cst_8 : f32 to vector<8x1xf32>
      %93 = arith.cmpf oge, %91, %92 : vector<8x1xf32>
      %94 = vector.broadcast %cst : f32 to vector<8x1xf32>
      %95 = arith.select %93, %83, %94 : vector<8x1xi1>, vector<8x1xf32>
      %96 = arith.maximumf %81, %95 : vector<8x1xf32>
      %c5_i32 = arith.constant 5 : i32
      %cst_33 = arith.constant dense<0xFF800000> : vector<8xf32>
      %97 = vector.multi_reduction <maximumf>, %87, %cst_33 [1] : vector<8x256xf32> to vector<8xf32>
      %98 = vector.shape_cast %97 : vector<8xf32> to vector<8x1xf32>
      %99 = vector.broadcast %98 : vector<8x1xf32> to vector<8x256xf32>
      %100 = arith.cmpf oge, %20, %99 : vector<8x256xf32>
      %101 = vector.broadcast %cst : f32 to vector<8x256xf32>
      %102 = arith.select %100, %101, %20 : vector<8x256xi1>, vector<8x256xf32>
      %103 = arith.extui %100 : vector<8x256xi1> to vector<8x256xi32>
      %104 = arith.sitofp %103 : vector<8x256xi32> to vector<8x256xf32>
      %cst_34 = arith.constant dense<0.000000e+00> : vector<8xf32>
      %105 = vector.multi_reduction <add>, %104, %cst_34 [1] : vector<8x256xf32> to vector<8xf32>
      %106 = vector.shape_cast %105 : vector<8xf32> to vector<8x1xf32>
      %107 = vector.broadcast %cst_8 : f32 to vector<8x1xf32>
      %108 = arith.cmpf oge, %106, %107 : vector<8x1xf32>
      %109 = vector.broadcast %cst : f32 to vector<8x1xf32>
      %110 = arith.select %108, %98, %109 : vector<8x1xi1>, vector<8x1xf32>
      %111 = arith.maximumf %96, %110 : vector<8x1xf32>
      %c6_i32 = arith.constant 6 : i32
      %cst_35 = arith.constant dense<0xFF800000> : vector<8xf32>
      %112 = vector.multi_reduction <maximumf>, %102, %cst_35 [1] : vector<8x256xf32> to vector<8xf32>
      %113 = vector.shape_cast %112 : vector<8xf32> to vector<8x1xf32>
      %114 = vector.broadcast %113 : vector<8x1xf32> to vector<8x256xf32>
      %115 = arith.cmpf oge, %20, %114 : vector<8x256xf32>
      %116 = vector.broadcast %cst : f32 to vector<8x256xf32>
      %117 = arith.select %115, %116, %20 : vector<8x256xi1>, vector<8x256xf32>
      %118 = arith.extui %115 : vector<8x256xi1> to vector<8x256xi32>
      %119 = arith.sitofp %118 : vector<8x256xi32> to vector<8x256xf32>
      %cst_36 = arith.constant dense<0.000000e+00> : vector<8xf32>
      %120 = vector.multi_reduction <add>, %119, %cst_36 [1] : vector<8x256xf32> to vector<8xf32>
      %121 = vector.shape_cast %120 : vector<8xf32> to vector<8x1xf32>
      %122 = vector.broadcast %cst_8 : f32 to vector<8x1xf32>
      %123 = arith.cmpf oge, %121, %122 : vector<8x1xf32>
      %124 = vector.broadcast %cst : f32 to vector<8x1xf32>
      %125 = arith.select %123, %113, %124 : vector<8x1xi1>, vector<8x1xf32>
      %126 = arith.maximumf %111, %125 : vector<8x1xf32>
      %c7_i32 = arith.constant 7 : i32
      %cst_37 = arith.constant dense<0xFF800000> : vector<8xf32>
      %127 = vector.multi_reduction <maximumf>, %117, %cst_37 [1] : vector<8x256xf32> to vector<8xf32>
      %128 = vector.shape_cast %127 : vector<8xf32> to vector<8x1xf32>
      %129 = vector.broadcast %128 : vector<8x1xf32> to vector<8x256xf32>
      %130 = arith.cmpf oge, %20, %129 : vector<8x256xf32>
      %131 = vector.broadcast %cst : f32 to vector<8x256xf32>
      %132 = arith.select %130, %131, %20 : vector<8x256xi1>, vector<8x256xf32>
      %133 = arith.extui %130 : vector<8x256xi1> to vector<8x256xi32>
      %134 = arith.sitofp %133 : vector<8x256xi32> to vector<8x256xf32>
      %cst_38 = arith.constant dense<0.000000e+00> : vector<8xf32>
      %135 = vector.multi_reduction <add>, %134, %cst_38 [1] : vector<8x256xf32> to vector<8xf32>
      %136 = vector.shape_cast %135 : vector<8xf32> to vector<8x1xf32>
      %137 = vector.broadcast %cst_8 : f32 to vector<8x1xf32>
      %138 = arith.cmpf oge, %136, %137 : vector<8x1xf32>
      %139 = vector.broadcast %cst : f32 to vector<8x1xf32>
      %140 = arith.select %138, %128, %139 : vector<8x1xi1>, vector<8x1xf32>
      %141 = arith.maximumf %126, %140 : vector<8x1xf32>
      %c8_i32_39 = arith.constant 8 : i32
      %cst_40 = arith.constant dense<0xFF800000> : vector<8xf32>
      %142 = vector.multi_reduction <maximumf>, %132, %cst_40 [1] : vector<8x256xf32> to vector<8xf32>
      %143 = vector.shape_cast %142 : vector<8xf32> to vector<8x1xf32>
      %144 = vector.broadcast %143 : vector<8x1xf32> to vector<8x256xf32>
      %145 = arith.cmpf oge, %20, %144 : vector<8x256xf32>
      %146 = vector.broadcast %cst : f32 to vector<8x256xf32>
      %147 = arith.select %145, %146, %20 : vector<8x256xi1>, vector<8x256xf32>
      %148 = arith.extui %145 : vector<8x256xi1> to vector<8x256xi32>
      %149 = arith.sitofp %148 : vector<8x256xi32> to vector<8x256xf32>
      %cst_41 = arith.constant dense<0.000000e+00> : vector<8xf32>
      %150 = vector.multi_reduction <add>, %149, %cst_41 [1] : vector<8x256xf32> to vector<8xf32>
      %151 = vector.shape_cast %150 : vector<8xf32> to vector<8x1xf32>
      %152 = vector.broadcast %cst_8 : f32 to vector<8x1xf32>
      %153 = arith.cmpf oge, %151, %152 : vector<8x1xf32>
      %154 = vector.broadcast %cst : f32 to vector<8x1xf32>
      %155 = arith.select %153, %143, %154 : vector<8x1xi1>, vector<8x1xf32>
      %156 = arith.maximumf %141, %155 : vector<8x1xf32>
      %c9_i32 = arith.constant 9 : i32
      %cst_42 = arith.constant dense<0xFF800000> : vector<8xf32>
      %157 = vector.multi_reduction <maximumf>, %147, %cst_42 [1] : vector<8x256xf32> to vector<8xf32>
      %158 = vector.shape_cast %157 : vector<8xf32> to vector<8x1xf32>
      %159 = vector.broadcast %158 : vector<8x1xf32> to vector<8x256xf32>
      %160 = arith.cmpf oge, %20, %159 : vector<8x256xf32>
      %161 = vector.broadcast %cst : f32 to vector<8x256xf32>
      %162 = arith.select %160, %161, %20 : vector<8x256xi1>, vector<8x256xf32>
      %163 = arith.extui %160 : vector<8x256xi1> to vector<8x256xi32>
      %164 = arith.sitofp %163 : vector<8x256xi32> to vector<8x256xf32>
      %cst_43 = arith.constant dense<0.000000e+00> : vector<8xf32>
      %165 = vector.multi_reduction <add>, %164, %cst_43 [1] : vector<8x256xf32> to vector<8xf32>
      %166 = vector.shape_cast %165 : vector<8xf32> to vector<8x1xf32>
      %167 = vector.broadcast %cst_8 : f32 to vector<8x1xf32>
      %168 = arith.cmpf oge, %166, %167 : vector<8x1xf32>
      %169 = vector.broadcast %cst : f32 to vector<8x1xf32>
      %170 = arith.select %168, %158, %169 : vector<8x1xi1>, vector<8x1xf32>
      %171 = arith.maximumf %156, %170 : vector<8x1xf32>
      %c10_i32 = arith.constant 10 : i32
      %cst_44 = arith.constant dense<0xFF800000> : vector<8xf32>
      %172 = vector.multi_reduction <maximumf>, %162, %cst_44 [1] : vector<8x256xf32> to vector<8xf32>
      %173 = vector.shape_cast %172 : vector<8xf32> to vector<8x1xf32>
      %174 = vector.broadcast %173 : vector<8x1xf32> to vector<8x256xf32>
      %175 = arith.cmpf oge, %20, %174 : vector<8x256xf32>
      %176 = vector.broadcast %cst : f32 to vector<8x256xf32>
      %177 = arith.select %175, %176, %20 : vector<8x256xi1>, vector<8x256xf32>
      %178 = arith.extui %175 : vector<8x256xi1> to vector<8x256xi32>
      %179 = arith.sitofp %178 : vector<8x256xi32> to vector<8x256xf32>
      %cst_45 = arith.constant dense<0.000000e+00> : vector<8xf32>
      %180 = vector.multi_reduction <add>, %179, %cst_45 [1] : vector<8x256xf32> to vector<8xf32>
      %181 = vector.shape_cast %180 : vector<8xf32> to vector<8x1xf32>
      %182 = vector.broadcast %cst_8 : f32 to vector<8x1xf32>
      %183 = arith.cmpf oge, %181, %182 : vector<8x1xf32>
      %184 = vector.broadcast %cst : f32 to vector<8x1xf32>
      %185 = arith.select %183, %173, %184 : vector<8x1xi1>, vector<8x1xf32>
      %186 = arith.maximumf %171, %185 : vector<8x1xf32>
      %c11_i32 = arith.constant 11 : i32
      %cst_46 = arith.constant dense<0xFF800000> : vector<8xf32>
      %187 = vector.multi_reduction <maximumf>, %177, %cst_46 [1] : vector<8x256xf32> to vector<8xf32>
      %188 = vector.shape_cast %187 : vector<8xf32> to vector<8x1xf32>
      %189 = vector.broadcast %188 : vector<8x1xf32> to vector<8x256xf32>
      %190 = arith.cmpf oge, %20, %189 : vector<8x256xf32>
      %191 = vector.broadcast %cst : f32 to vector<8x256xf32>
      %192 = arith.select %190, %191, %20 : vector<8x256xi1>, vector<8x256xf32>
      %193 = arith.extui %190 : vector<8x256xi1> to vector<8x256xi32>
      %194 = arith.sitofp %193 : vector<8x256xi32> to vector<8x256xf32>
      %cst_47 = arith.constant dense<0.000000e+00> : vector<8xf32>
      %195 = vector.multi_reduction <add>, %194, %cst_47 [1] : vector<8x256xf32> to vector<8xf32>
      %196 = vector.shape_cast %195 : vector<8xf32> to vector<8x1xf32>
      %197 = vector.broadcast %cst_8 : f32 to vector<8x1xf32>
      %198 = arith.cmpf oge, %196, %197 : vector<8x1xf32>
      %199 = vector.broadcast %cst : f32 to vector<8x1xf32>
      %200 = arith.select %198, %188, %199 : vector<8x1xi1>, vector<8x1xf32>
      %201 = arith.maximumf %186, %200 : vector<8x1xf32>
      %c12_i32 = arith.constant 12 : i32
      %cst_48 = arith.constant dense<0xFF800000> : vector<8xf32>
      %202 = vector.multi_reduction <maximumf>, %192, %cst_48 [1] : vector<8x256xf32> to vector<8xf32>
      %203 = vector.shape_cast %202 : vector<8xf32> to vector<8x1xf32>
      %204 = vector.broadcast %203 : vector<8x1xf32> to vector<8x256xf32>
      %205 = arith.cmpf oge, %20, %204 : vector<8x256xf32>
      %206 = vector.broadcast %cst : f32 to vector<8x256xf32>
      %207 = arith.select %205, %206, %20 : vector<8x256xi1>, vector<8x256xf32>
      %208 = arith.extui %205 : vector<8x256xi1> to vector<8x256xi32>
      %209 = arith.sitofp %208 : vector<8x256xi32> to vector<8x256xf32>
      %cst_49 = arith.constant dense<0.000000e+00> : vector<8xf32>
      %210 = vector.multi_reduction <add>, %209, %cst_49 [1] : vector<8x256xf32> to vector<8xf32>
      %211 = vector.shape_cast %210 : vector<8xf32> to vector<8x1xf32>
      %212 = vector.broadcast %cst_8 : f32 to vector<8x1xf32>
      %213 = arith.cmpf oge, %211, %212 : vector<8x1xf32>
      %214 = vector.broadcast %cst : f32 to vector<8x1xf32>
      %215 = arith.select %213, %203, %214 : vector<8x1xi1>, vector<8x1xf32>
      %216 = arith.maximumf %201, %215 : vector<8x1xf32>
      %c13_i32 = arith.constant 13 : i32
      %cst_50 = arith.constant dense<0xFF800000> : vector<8xf32>
      %217 = vector.multi_reduction <maximumf>, %207, %cst_50 [1] : vector<8x256xf32> to vector<8xf32>
      %218 = vector.shape_cast %217 : vector<8xf32> to vector<8x1xf32>
      %219 = vector.broadcast %218 : vector<8x1xf32> to vector<8x256xf32>
      %220 = arith.cmpf oge, %20, %219 : vector<8x256xf32>
      %221 = vector.broadcast %cst : f32 to vector<8x256xf32>
      %222 = arith.select %220, %221, %20 : vector<8x256xi1>, vector<8x256xf32>
      %223 = arith.extui %220 : vector<8x256xi1> to vector<8x256xi32>
      %224 = arith.sitofp %223 : vector<8x256xi32> to vector<8x256xf32>
      %cst_51 = arith.constant dense<0.000000e+00> : vector<8xf32>
      %225 = vector.multi_reduction <add>, %224, %cst_51 [1] : vector<8x256xf32> to vector<8xf32>
      %226 = vector.shape_cast %225 : vector<8xf32> to vector<8x1xf32>
      %227 = vector.broadcast %cst_8 : f32 to vector<8x1xf32>
      %228 = arith.cmpf oge, %226, %227 : vector<8x1xf32>
      %229 = vector.broadcast %cst : f32 to vector<8x1xf32>
      %230 = arith.select %228, %218, %229 : vector<8x1xi1>, vector<8x1xf32>
      %231 = arith.maximumf %216, %230 : vector<8x1xf32>
      %c14_i32 = arith.constant 14 : i32
      %cst_52 = arith.constant dense<0xFF800000> : vector<8xf32>
      %232 = vector.multi_reduction <maximumf>, %222, %cst_52 [1] : vector<8x256xf32> to vector<8xf32>
      %233 = vector.shape_cast %232 : vector<8xf32> to vector<8x1xf32>
      %234 = vector.broadcast %233 : vector<8x1xf32> to vector<8x256xf32>
      %235 = arith.cmpf oge, %20, %234 : vector<8x256xf32>
      %236 = vector.broadcast %cst : f32 to vector<8x256xf32>
      %237 = arith.select %235, %236, %20 : vector<8x256xi1>, vector<8x256xf32>
      %238 = arith.extui %235 : vector<8x256xi1> to vector<8x256xi32>
      %239 = arith.sitofp %238 : vector<8x256xi32> to vector<8x256xf32>
      %cst_53 = arith.constant dense<0.000000e+00> : vector<8xf32>
      %240 = vector.multi_reduction <add>, %239, %cst_53 [1] : vector<8x256xf32> to vector<8xf32>
      %241 = vector.shape_cast %240 : vector<8xf32> to vector<8x1xf32>
      %242 = vector.broadcast %cst_8 : f32 to vector<8x1xf32>
      %243 = arith.cmpf oge, %241, %242 : vector<8x1xf32>
      %244 = vector.broadcast %cst : f32 to vector<8x1xf32>
      %245 = arith.select %243, %233, %244 : vector<8x1xi1>, vector<8x1xf32>
      %246 = arith.maximumf %231, %245 : vector<8x1xf32>
      %c15_i32 = arith.constant 15 : i32
      %cst_54 = arith.constant dense<0xFF800000> : vector<8xf32>
      %247 = vector.multi_reduction <maximumf>, %237, %cst_54 [1] : vector<8x256xf32> to vector<8xf32>
      %248 = vector.shape_cast %247 : vector<8xf32> to vector<8x1xf32>
      %249 = vector.broadcast %248 : vector<8x1xf32> to vector<8x256xf32>
      %250 = arith.cmpf oge, %20, %249 : vector<8x256xf32>
      %251 = vector.broadcast %cst : f32 to vector<8x256xf32>
      %252 = arith.select %250, %251, %20 : vector<8x256xi1>, vector<8x256xf32>
      %253 = arith.extui %250 : vector<8x256xi1> to vector<8x256xi32>
      %254 = arith.sitofp %253 : vector<8x256xi32> to vector<8x256xf32>
      %cst_55 = arith.constant dense<0.000000e+00> : vector<8xf32>
      %255 = vector.multi_reduction <add>, %254, %cst_55 [1] : vector<8x256xf32> to vector<8xf32>
      %256 = vector.shape_cast %255 : vector<8xf32> to vector<8x1xf32>
      %257 = vector.broadcast %cst_8 : f32 to vector<8x1xf32>
      %258 = arith.cmpf oge, %256, %257 : vector<8x1xf32>
      %259 = vector.broadcast %cst : f32 to vector<8x1xf32>
      %260 = arith.select %258, %248, %259 : vector<8x1xi1>, vector<8x1xf32>
      %261 = arith.maximumf %246, %260 : vector<8x1xf32>
      %c16_i32 = arith.constant 16 : i32
      %cst_56 = arith.constant dense<0xFF800000> : vector<8xf32>
      %262 = vector.multi_reduction <maximumf>, %252, %cst_56 [1] : vector<8x256xf32> to vector<8xf32>
      %263 = vector.shape_cast %262 : vector<8xf32> to vector<8x1xf32>
      %264 = vector.broadcast %263 : vector<8x1xf32> to vector<8x256xf32>
      %265 = arith.cmpf oge, %20, %264 : vector<8x256xf32>
      %266 = vector.broadcast %cst : f32 to vector<8x256xf32>
      %267 = arith.select %265, %266, %20 : vector<8x256xi1>, vector<8x256xf32>
      %268 = arith.extui %265 : vector<8x256xi1> to vector<8x256xi32>
      %269 = arith.sitofp %268 : vector<8x256xi32> to vector<8x256xf32>
      %cst_57 = arith.constant dense<0.000000e+00> : vector<8xf32>
      %270 = vector.multi_reduction <add>, %269, %cst_57 [1] : vector<8x256xf32> to vector<8xf32>
      %271 = vector.shape_cast %270 : vector<8xf32> to vector<8x1xf32>
      %272 = vector.broadcast %cst_8 : f32 to vector<8x1xf32>
      %273 = arith.cmpf oge, %271, %272 : vector<8x1xf32>
      %274 = vector.broadcast %cst : f32 to vector<8x1xf32>
      %275 = arith.select %273, %263, %274 : vector<8x1xi1>, vector<8x1xf32>
      %276 = arith.maximumf %261, %275 : vector<8x1xf32>
      %c17_i32 = arith.constant 17 : i32
      %cst_58 = arith.constant dense<0xFF800000> : vector<8xf32>
      %277 = vector.multi_reduction <maximumf>, %267, %cst_58 [1] : vector<8x256xf32> to vector<8xf32>
      %278 = vector.shape_cast %277 : vector<8xf32> to vector<8x1xf32>
      %279 = vector.broadcast %278 : vector<8x1xf32> to vector<8x256xf32>
      %280 = arith.cmpf oge, %20, %279 : vector<8x256xf32>
      %281 = vector.broadcast %cst : f32 to vector<8x256xf32>
      %282 = arith.select %280, %281, %20 : vector<8x256xi1>, vector<8x256xf32>
      %283 = arith.extui %280 : vector<8x256xi1> to vector<8x256xi32>
      %284 = arith.sitofp %283 : vector<8x256xi32> to vector<8x256xf32>
      %cst_59 = arith.constant dense<0.000000e+00> : vector<8xf32>
      %285 = vector.multi_reduction <add>, %284, %cst_59 [1] : vector<8x256xf32> to vector<8xf32>
      %286 = vector.shape_cast %285 : vector<8xf32> to vector<8x1xf32>
      %287 = vector.broadcast %cst_8 : f32 to vector<8x1xf32>
      %288 = arith.cmpf oge, %286, %287 : vector<8x1xf32>
      %289 = vector.broadcast %cst : f32 to vector<8x1xf32>
      %290 = arith.select %288, %278, %289 : vector<8x1xi1>, vector<8x1xf32>
      %291 = arith.maximumf %276, %290 : vector<8x1xf32>
      %c18_i32 = arith.constant 18 : i32
      %cst_60 = arith.constant dense<0xFF800000> : vector<8xf32>
      %292 = vector.multi_reduction <maximumf>, %282, %cst_60 [1] : vector<8x256xf32> to vector<8xf32>
      %293 = vector.shape_cast %292 : vector<8xf32> to vector<8x1xf32>
      %294 = vector.broadcast %293 : vector<8x1xf32> to vector<8x256xf32>
      %295 = arith.cmpf oge, %20, %294 : vector<8x256xf32>
      %296 = vector.broadcast %cst : f32 to vector<8x256xf32>
      %297 = arith.select %295, %296, %20 : vector<8x256xi1>, vector<8x256xf32>
      %298 = arith.extui %295 : vector<8x256xi1> to vector<8x256xi32>
      %299 = arith.sitofp %298 : vector<8x256xi32> to vector<8x256xf32>
      %cst_61 = arith.constant dense<0.000000e+00> : vector<8xf32>
      %300 = vector.multi_reduction <add>, %299, %cst_61 [1] : vector<8x256xf32> to vector<8xf32>
      %301 = vector.shape_cast %300 : vector<8xf32> to vector<8x1xf32>
      %302 = vector.broadcast %cst_8 : f32 to vector<8x1xf32>
      %303 = arith.cmpf oge, %301, %302 : vector<8x1xf32>
      %304 = vector.broadcast %cst : f32 to vector<8x1xf32>
      %305 = arith.select %303, %293, %304 : vector<8x1xi1>, vector<8x1xf32>
      %306 = arith.maximumf %291, %305 : vector<8x1xf32>
      %c19_i32 = arith.constant 19 : i32
      %cst_62 = arith.constant dense<0xFF800000> : vector<8xf32>
      %307 = vector.multi_reduction <maximumf>, %297, %cst_62 [1] : vector<8x256xf32> to vector<8xf32>
      %308 = vector.shape_cast %307 : vector<8xf32> to vector<8x1xf32>
      %309 = vector.broadcast %308 : vector<8x1xf32> to vector<8x256xf32>
      %310 = arith.cmpf oge, %20, %309 : vector<8x256xf32>
      %311 = vector.broadcast %cst : f32 to vector<8x256xf32>
      %312 = arith.select %310, %311, %20 : vector<8x256xi1>, vector<8x256xf32>
      %313 = arith.extui %310 : vector<8x256xi1> to vector<8x256xi32>
      %314 = arith.sitofp %313 : vector<8x256xi32> to vector<8x256xf32>
      %cst_63 = arith.constant dense<0.000000e+00> : vector<8xf32>
      %315 = vector.multi_reduction <add>, %314, %cst_63 [1] : vector<8x256xf32> to vector<8xf32>
      %316 = vector.shape_cast %315 : vector<8xf32> to vector<8x1xf32>
      %317 = vector.broadcast %cst_8 : f32 to vector<8x1xf32>
      %318 = arith.cmpf oge, %316, %317 : vector<8x1xf32>
      %319 = vector.broadcast %cst : f32 to vector<8x1xf32>
      %320 = arith.select %318, %308, %319 : vector<8x1xi1>, vector<8x1xf32>
      %321 = arith.maximumf %306, %320 : vector<8x1xf32>
      %c20_i32 = arith.constant 20 : i32
      %cst_64 = arith.constant dense<0xFF800000> : vector<8xf32>
      %322 = vector.multi_reduction <maximumf>, %312, %cst_64 [1] : vector<8x256xf32> to vector<8xf32>
      %323 = vector.shape_cast %322 : vector<8xf32> to vector<8x1xf32>
      %324 = vector.broadcast %323 : vector<8x1xf32> to vector<8x256xf32>
      %325 = arith.cmpf oge, %20, %324 : vector<8x256xf32>
      %326 = vector.broadcast %cst : f32 to vector<8x256xf32>
      %327 = arith.select %325, %326, %20 : vector<8x256xi1>, vector<8x256xf32>
      %328 = arith.extui %325 : vector<8x256xi1> to vector<8x256xi32>
      %329 = arith.sitofp %328 : vector<8x256xi32> to vector<8x256xf32>
      %cst_65 = arith.constant dense<0.000000e+00> : vector<8xf32>
      %330 = vector.multi_reduction <add>, %329, %cst_65 [1] : vector<8x256xf32> to vector<8xf32>
      %331 = vector.shape_cast %330 : vector<8xf32> to vector<8x1xf32>
      %332 = vector.broadcast %cst_8 : f32 to vector<8x1xf32>
      %333 = arith.cmpf oge, %331, %332 : vector<8x1xf32>
      %334 = vector.broadcast %cst : f32 to vector<8x1xf32>
      %335 = arith.select %333, %323, %334 : vector<8x1xi1>, vector<8x1xf32>
      %336 = arith.maximumf %321, %335 : vector<8x1xf32>
      %c21_i32 = arith.constant 21 : i32
      %cst_66 = arith.constant dense<0xFF800000> : vector<8xf32>
      %337 = vector.multi_reduction <maximumf>, %327, %cst_66 [1] : vector<8x256xf32> to vector<8xf32>
      %338 = vector.shape_cast %337 : vector<8xf32> to vector<8x1xf32>
      %339 = vector.broadcast %338 : vector<8x1xf32> to vector<8x256xf32>
      %340 = arith.cmpf oge, %20, %339 : vector<8x256xf32>
      %341 = vector.broadcast %cst : f32 to vector<8x256xf32>
      %342 = arith.select %340, %341, %20 : vector<8x256xi1>, vector<8x256xf32>
      %343 = arith.extui %340 : vector<8x256xi1> to vector<8x256xi32>
      %344 = arith.sitofp %343 : vector<8x256xi32> to vector<8x256xf32>
      %cst_67 = arith.constant dense<0.000000e+00> : vector<8xf32>
      %345 = vector.multi_reduction <add>, %344, %cst_67 [1] : vector<8x256xf32> to vector<8xf32>
      %346 = vector.shape_cast %345 : vector<8xf32> to vector<8x1xf32>
      %347 = vector.broadcast %cst_8 : f32 to vector<8x1xf32>
      %348 = arith.cmpf oge, %346, %347 : vector<8x1xf32>
      %349 = vector.broadcast %cst : f32 to vector<8x1xf32>
      %350 = arith.select %348, %338, %349 : vector<8x1xi1>, vector<8x1xf32>
      %351 = arith.maximumf %336, %350 : vector<8x1xf32>
      %c22_i32 = arith.constant 22 : i32
      %cst_68 = arith.constant dense<0xFF800000> : vector<8xf32>
      %352 = vector.multi_reduction <maximumf>, %342, %cst_68 [1] : vector<8x256xf32> to vector<8xf32>
      %353 = vector.shape_cast %352 : vector<8xf32> to vector<8x1xf32>
      %354 = vector.broadcast %353 : vector<8x1xf32> to vector<8x256xf32>
      %355 = arith.cmpf oge, %20, %354 : vector<8x256xf32>
      %356 = vector.broadcast %cst : f32 to vector<8x256xf32>
      %357 = arith.select %355, %356, %20 : vector<8x256xi1>, vector<8x256xf32>
      %358 = arith.extui %355 : vector<8x256xi1> to vector<8x256xi32>
      %359 = arith.sitofp %358 : vector<8x256xi32> to vector<8x256xf32>
      %cst_69 = arith.constant dense<0.000000e+00> : vector<8xf32>
      %360 = vector.multi_reduction <add>, %359, %cst_69 [1] : vector<8x256xf32> to vector<8xf32>
      %361 = vector.shape_cast %360 : vector<8xf32> to vector<8x1xf32>
      %362 = vector.broadcast %cst_8 : f32 to vector<8x1xf32>
      %363 = arith.cmpf oge, %361, %362 : vector<8x1xf32>
      %364 = vector.broadcast %cst : f32 to vector<8x1xf32>
      %365 = arith.select %363, %353, %364 : vector<8x1xi1>, vector<8x1xf32>
      %366 = arith.maximumf %351, %365 : vector<8x1xf32>
      %c23_i32 = arith.constant 23 : i32
      %cst_70 = arith.constant dense<0xFF800000> : vector<8xf32>
      %367 = vector.multi_reduction <maximumf>, %357, %cst_70 [1] : vector<8x256xf32> to vector<8xf32>
      %368 = vector.shape_cast %367 : vector<8xf32> to vector<8x1xf32>
      %369 = vector.broadcast %368 : vector<8x1xf32> to vector<8x256xf32>
      %370 = arith.cmpf oge, %20, %369 : vector<8x256xf32>
      %371 = vector.broadcast %cst : f32 to vector<8x256xf32>
      %372 = arith.select %370, %371, %20 : vector<8x256xi1>, vector<8x256xf32>
      %373 = arith.extui %370 : vector<8x256xi1> to vector<8x256xi32>
      %374 = arith.sitofp %373 : vector<8x256xi32> to vector<8x256xf32>
      %cst_71 = arith.constant dense<0.000000e+00> : vector<8xf32>
      %375 = vector.multi_reduction <add>, %374, %cst_71 [1] : vector<8x256xf32> to vector<8xf32>
      %376 = vector.shape_cast %375 : vector<8xf32> to vector<8x1xf32>
      %377 = vector.broadcast %cst_8 : f32 to vector<8x1xf32>
      %378 = arith.cmpf oge, %376, %377 : vector<8x1xf32>
      %379 = vector.broadcast %cst : f32 to vector<8x1xf32>
      %380 = arith.select %378, %368, %379 : vector<8x1xi1>, vector<8x1xf32>
      %381 = arith.maximumf %366, %380 : vector<8x1xf32>
      %c24_i32 = arith.constant 24 : i32
      %cst_72 = arith.constant dense<0xFF800000> : vector<8xf32>
      %382 = vector.multi_reduction <maximumf>, %372, %cst_72 [1] : vector<8x256xf32> to vector<8xf32>
      %383 = vector.shape_cast %382 : vector<8xf32> to vector<8x1xf32>
      %384 = vector.broadcast %383 : vector<8x1xf32> to vector<8x256xf32>
      %385 = arith.cmpf oge, %20, %384 : vector<8x256xf32>
      %386 = vector.broadcast %cst : f32 to vector<8x256xf32>
      %387 = arith.select %385, %386, %20 : vector<8x256xi1>, vector<8x256xf32>
      %388 = arith.extui %385 : vector<8x256xi1> to vector<8x256xi32>
      %389 = arith.sitofp %388 : vector<8x256xi32> to vector<8x256xf32>
      %cst_73 = arith.constant dense<0.000000e+00> : vector<8xf32>
      %390 = vector.multi_reduction <add>, %389, %cst_73 [1] : vector<8x256xf32> to vector<8xf32>
      %391 = vector.shape_cast %390 : vector<8xf32> to vector<8x1xf32>
      %392 = vector.broadcast %cst_8 : f32 to vector<8x1xf32>
      %393 = arith.cmpf oge, %391, %392 : vector<8x1xf32>
      %394 = vector.broadcast %cst : f32 to vector<8x1xf32>
      %395 = arith.select %393, %383, %394 : vector<8x1xi1>, vector<8x1xf32>
      %396 = arith.maximumf %381, %395 : vector<8x1xf32>
      %c25_i32 = arith.constant 25 : i32
      %cst_74 = arith.constant dense<0xFF800000> : vector<8xf32>
      %397 = vector.multi_reduction <maximumf>, %387, %cst_74 [1] : vector<8x256xf32> to vector<8xf32>
      %398 = vector.shape_cast %397 : vector<8xf32> to vector<8x1xf32>
      %399 = vector.broadcast %398 : vector<8x1xf32> to vector<8x256xf32>
      %400 = arith.cmpf oge, %20, %399 : vector<8x256xf32>
      %401 = vector.broadcast %cst : f32 to vector<8x256xf32>
      %402 = arith.select %400, %401, %20 : vector<8x256xi1>, vector<8x256xf32>
      %403 = arith.extui %400 : vector<8x256xi1> to vector<8x256xi32>
      %404 = arith.sitofp %403 : vector<8x256xi32> to vector<8x256xf32>
      %cst_75 = arith.constant dense<0.000000e+00> : vector<8xf32>
      %405 = vector.multi_reduction <add>, %404, %cst_75 [1] : vector<8x256xf32> to vector<8xf32>
      %406 = vector.shape_cast %405 : vector<8xf32> to vector<8x1xf32>
      %407 = vector.broadcast %cst_8 : f32 to vector<8x1xf32>
      %408 = arith.cmpf oge, %406, %407 : vector<8x1xf32>
      %409 = vector.broadcast %cst : f32 to vector<8x1xf32>
      %410 = arith.select %408, %398, %409 : vector<8x1xi1>, vector<8x1xf32>
      %411 = arith.maximumf %396, %410 : vector<8x1xf32>
      %c26_i32 = arith.constant 26 : i32
      %cst_76 = arith.constant dense<0xFF800000> : vector<8xf32>
      %412 = vector.multi_reduction <maximumf>, %402, %cst_76 [1] : vector<8x256xf32> to vector<8xf32>
      %413 = vector.shape_cast %412 : vector<8xf32> to vector<8x1xf32>
      %414 = vector.broadcast %413 : vector<8x1xf32> to vector<8x256xf32>
      %415 = arith.cmpf oge, %20, %414 : vector<8x256xf32>
      %416 = vector.broadcast %cst : f32 to vector<8x256xf32>
      %417 = arith.select %415, %416, %20 : vector<8x256xi1>, vector<8x256xf32>
      %418 = arith.extui %415 : vector<8x256xi1> to vector<8x256xi32>
      %419 = arith.sitofp %418 : vector<8x256xi32> to vector<8x256xf32>
      %cst_77 = arith.constant dense<0.000000e+00> : vector<8xf32>
      %420 = vector.multi_reduction <add>, %419, %cst_77 [1] : vector<8x256xf32> to vector<8xf32>
      %421 = vector.shape_cast %420 : vector<8xf32> to vector<8x1xf32>
      %422 = vector.broadcast %cst_8 : f32 to vector<8x1xf32>
      %423 = arith.cmpf oge, %421, %422 : vector<8x1xf32>
      %424 = vector.broadcast %cst : f32 to vector<8x1xf32>
      %425 = arith.select %423, %413, %424 : vector<8x1xi1>, vector<8x1xf32>
      %426 = arith.maximumf %411, %425 : vector<8x1xf32>
      %c27_i32 = arith.constant 27 : i32
      %cst_78 = arith.constant dense<0xFF800000> : vector<8xf32>
      %427 = vector.multi_reduction <maximumf>, %417, %cst_78 [1] : vector<8x256xf32> to vector<8xf32>
      %428 = vector.shape_cast %427 : vector<8xf32> to vector<8x1xf32>
      %429 = vector.broadcast %428 : vector<8x1xf32> to vector<8x256xf32>
      %430 = arith.cmpf oge, %20, %429 : vector<8x256xf32>
      %431 = vector.broadcast %cst : f32 to vector<8x256xf32>
      %432 = arith.select %430, %431, %20 : vector<8x256xi1>, vector<8x256xf32>
      %433 = arith.extui %430 : vector<8x256xi1> to vector<8x256xi32>
      %434 = arith.sitofp %433 : vector<8x256xi32> to vector<8x256xf32>
      %cst_79 = arith.constant dense<0.000000e+00> : vector<8xf32>
      %435 = vector.multi_reduction <add>, %434, %cst_79 [1] : vector<8x256xf32> to vector<8xf32>
      %436 = vector.shape_cast %435 : vector<8xf32> to vector<8x1xf32>
      %437 = vector.broadcast %cst_8 : f32 to vector<8x1xf32>
      %438 = arith.cmpf oge, %436, %437 : vector<8x1xf32>
      %439 = vector.broadcast %cst : f32 to vector<8x1xf32>
      %440 = arith.select %438, %428, %439 : vector<8x1xi1>, vector<8x1xf32>
      %441 = arith.maximumf %426, %440 : vector<8x1xf32>
      %c28_i32 = arith.constant 28 : i32
      %cst_80 = arith.constant dense<0xFF800000> : vector<8xf32>
      %442 = vector.multi_reduction <maximumf>, %432, %cst_80 [1] : vector<8x256xf32> to vector<8xf32>
      %443 = vector.shape_cast %442 : vector<8xf32> to vector<8x1xf32>
      %444 = vector.broadcast %443 : vector<8x1xf32> to vector<8x256xf32>
      %445 = arith.cmpf oge, %20, %444 : vector<8x256xf32>
      %446 = vector.broadcast %cst : f32 to vector<8x256xf32>
      %447 = arith.select %445, %446, %20 : vector<8x256xi1>, vector<8x256xf32>
      %448 = arith.extui %445 : vector<8x256xi1> to vector<8x256xi32>
      %449 = arith.sitofp %448 : vector<8x256xi32> to vector<8x256xf32>
      %cst_81 = arith.constant dense<0.000000e+00> : vector<8xf32>
      %450 = vector.multi_reduction <add>, %449, %cst_81 [1] : vector<8x256xf32> to vector<8xf32>
      %451 = vector.shape_cast %450 : vector<8xf32> to vector<8x1xf32>
      %452 = vector.broadcast %cst_8 : f32 to vector<8x1xf32>
      %453 = arith.cmpf oge, %451, %452 : vector<8x1xf32>
      %454 = vector.broadcast %cst : f32 to vector<8x1xf32>
      %455 = arith.select %453, %443, %454 : vector<8x1xi1>, vector<8x1xf32>
      %456 = arith.maximumf %441, %455 : vector<8x1xf32>
      %c29_i32 = arith.constant 29 : i32
      %cst_82 = arith.constant dense<0xFF800000> : vector<8xf32>
      %457 = vector.multi_reduction <maximumf>, %447, %cst_82 [1] : vector<8x256xf32> to vector<8xf32>
      %458 = vector.shape_cast %457 : vector<8xf32> to vector<8x1xf32>
      %459 = vector.broadcast %458 : vector<8x1xf32> to vector<8x256xf32>
      %460 = arith.cmpf oge, %20, %459 : vector<8x256xf32>
      %461 = vector.broadcast %cst : f32 to vector<8x256xf32>
      %462 = arith.select %460, %461, %20 : vector<8x256xi1>, vector<8x256xf32>
      %463 = arith.extui %460 : vector<8x256xi1> to vector<8x256xi32>
      %464 = arith.sitofp %463 : vector<8x256xi32> to vector<8x256xf32>
      %cst_83 = arith.constant dense<0.000000e+00> : vector<8xf32>
      %465 = vector.multi_reduction <add>, %464, %cst_83 [1] : vector<8x256xf32> to vector<8xf32>
      %466 = vector.shape_cast %465 : vector<8xf32> to vector<8x1xf32>
      %467 = vector.broadcast %cst_8 : f32 to vector<8x1xf32>
      %468 = arith.cmpf oge, %466, %467 : vector<8x1xf32>
      %469 = vector.broadcast %cst : f32 to vector<8x1xf32>
      %470 = arith.select %468, %458, %469 : vector<8x1xi1>, vector<8x1xf32>
      %471 = arith.maximumf %456, %470 : vector<8x1xf32>
      %c30_i32 = arith.constant 30 : i32
      %cst_84 = arith.constant dense<0xFF800000> : vector<8xf32>
      %472 = vector.multi_reduction <maximumf>, %462, %cst_84 [1] : vector<8x256xf32> to vector<8xf32>
      %473 = vector.shape_cast %472 : vector<8xf32> to vector<8x1xf32>
      %474 = vector.broadcast %473 : vector<8x1xf32> to vector<8x256xf32>
      %475 = arith.cmpf oge, %20, %474 : vector<8x256xf32>
      %476 = vector.broadcast %cst : f32 to vector<8x256xf32>
      %477 = arith.select %475, %476, %20 : vector<8x256xi1>, vector<8x256xf32>
      %478 = arith.extui %475 : vector<8x256xi1> to vector<8x256xi32>
      %479 = arith.sitofp %478 : vector<8x256xi32> to vector<8x256xf32>
      %cst_85 = arith.constant dense<0.000000e+00> : vector<8xf32>
      %480 = vector.multi_reduction <add>, %479, %cst_85 [1] : vector<8x256xf32> to vector<8xf32>
      %481 = vector.shape_cast %480 : vector<8xf32> to vector<8x1xf32>
      %482 = vector.broadcast %cst_8 : f32 to vector<8x1xf32>
      %483 = arith.cmpf oge, %481, %482 : vector<8x1xf32>
      %484 = vector.broadcast %cst : f32 to vector<8x1xf32>
      %485 = arith.select %483, %473, %484 : vector<8x1xi1>, vector<8x1xf32>
      %486 = arith.maximumf %471, %485 : vector<8x1xf32>
      %c31_i32 = arith.constant 31 : i32
      %cst_86 = arith.constant dense<0xFF800000> : vector<8xf32>
      %487 = vector.multi_reduction <maximumf>, %477, %cst_86 [1] : vector<8x256xf32> to vector<8xf32>
      %488 = vector.shape_cast %487 : vector<8xf32> to vector<8x1xf32>
      %489 = vector.broadcast %488 : vector<8x1xf32> to vector<8x256xf32>
      %490 = arith.cmpf oge, %20, %489 : vector<8x256xf32>
      %491 = vector.broadcast %cst : f32 to vector<8x256xf32>
      %492 = arith.select %490, %491, %20 : vector<8x256xi1>, vector<8x256xf32>
      %493 = arith.extui %490 : vector<8x256xi1> to vector<8x256xi32>
      %494 = arith.sitofp %493 : vector<8x256xi32> to vector<8x256xf32>
      %cst_87 = arith.constant dense<0.000000e+00> : vector<8xf32>
      %495 = vector.multi_reduction <add>, %494, %cst_87 [1] : vector<8x256xf32> to vector<8xf32>
      %496 = vector.shape_cast %495 : vector<8xf32> to vector<8x1xf32>
      %497 = vector.broadcast %cst_8 : f32 to vector<8x1xf32>
      %498 = arith.cmpf oge, %496, %497 : vector<8x1xf32>
      %499 = vector.broadcast %cst : f32 to vector<8x1xf32>
      %500 = arith.select %498, %488, %499 : vector<8x1xi1>, vector<8x1xf32>
      %501 = arith.maximumf %486, %500 : vector<8x1xf32>
      %502 = vector.broadcast %501 : vector<8x1xf32> to vector<8x256xf32>
      %503 = arith.cmpf oge, %20, %502 : vector<8x256xf32>
      %cst_88 = arith.constant 0.000000e+00 : f32
      %504 = vector.broadcast %cst_88 : f32 to vector<8x256xf32>
      %505 = arith.select %503, %20, %504 : vector<8x256xi1>, vector<8x256xf32>
      %506 = vector.broadcast %3 : f32 to vector<8x256xf32>
      %507 = arith.mulf %506, %arg10 : vector<8x256xf32>
      %cst_89 = arith.constant 1.000000e+00 : f32
      %508 = arith.subf %cst_89, %3 : f32
      %509 = vector.broadcast %508 : f32 to vector<8x256xf32>
      %510 = arith.mulf %509, %505 : vector<8x256xf32>
      %511 = arith.addf %507, %510 : vector<8x256xf32>
      scf.yield %505, %511 : vector<8x256xf32>, vector<8x256xf32>
    }
    %c8_i32_10 = arith.constant 8 : i32
    %c0_11 = arith.constant 0 : index
    %c0_12 = arith.constant 0 : index
    %9 = vector.load %arg6[%c0_11, %c0_12] : memref<8x256xf32, #tpu.memory_space<vmem>>, vector<8x256xf32>
    tpu.vector_store %arg6[%c0_11, %c0_12], %8#0 {strides = array<i32>} : memref<8x256xf32, #tpu.memory_space<vmem>>, vector<8x256xf32>,
    %c0_13 = arith.constant 0 : index
    %c0_14 = arith.constant 0 : index
    %10 = vector.load %arg7[%c0_13, %c0_14] : memref<8x256xf32, #tpu.memory_space<vmem>>, vector<8x256xf32>
    tpu.vector_store %arg7[%c0_13, %c0_14], %8#1 {strides = array<i32>} : memref<8x256xf32, #tpu.memory_space<vmem>>, vector<8x256xf32>,
    %c0_i32_15 = arith.constant 0 : i32
    %11 = arith.cmpi eq, %arg1, %c0_i32_15 : i32
    %12 = arith.extui %11 : i1 to i32
    %c0_i32_16 = arith.constant 0 : i32
    %13 = arith.cmpi ne, %12, %c0_i32_16 : i32
    scf.if %13 {
      %c0_17 = arith.constant 0 : index
      %c0_18 = arith.constant 0 : index
      %14 = vector.load %arg5[%c0_17, %c0_18] : memref<8x256xf32, #tpu.memory_space<vmem>>, vector<8x256xf32>
      tpu.vector_store %arg5[%c0_17, %c0_18], %8#1 {strides = array<i32>} : memref<8x256xf32, #tpu.memory_space<vmem>>, vector<8x256xf32>,
    } else {
    }
    return
  }
  func.func @transform_0(%arg0: i32, %arg1: i32) -> (i32, i32) {
    %c0_i32 = arith.constant 0 : i32
    %c0_i32_0 = arith.constant 0 : i32
    %c0_i32_1 = arith.constant 0 : i32
    return %c0_i32, %c0_i32_0 : i32, i32
  }
  func.func @transform_1(%arg0: i32, %arg1: i32) -> (i32, i32, i32) {
    %c0_i32 = arith.constant 0 : i32
    %c0_i32_0 = arith.constant 0 : i32
    return %arg1, %arg0, %c0_i32 : i32, i32, i32
  }
  func.func @transform_2(%arg0: i32, %arg1: i32) -> (i32, i32) {
    %c0_i32 = arith.constant 0 : i32
    %c0_i32_0 = arith.constant 0 : i32
    %c0_i32_1 = arith.constant 0 : i32
    return %c0_i32, %c0_i32_0 : i32, i32
  }
  func.func @transform_3(%arg0: i32, %arg1: i32) -> (i32, i32) {
    %c0_i32 = arith.constant 0 : i32
    %c0_i32_0 = arith.constant 0 : i32
    return %arg0, %c0_i32 : i32, i32
  }
}

</mosaic_0001>

<llo_original>
// kernel: ssma_forward.2
$region0: #{ssma_forward.2}
  #allocation0 [shape = 'u32[]', space=smem, size = 0x4, offset = 0x4, fixed_abs, tag = 'smem constant byte address 0x4 - core index']
  #allocation1 [shape = 'u32[144,128]{1,0:T(1,128)}', space=vmem, size = 0x12000, scoped, tag = 'internal scratch']
  %s0 = inlined_call_operand.vmem [shape: f32[16,32], index: 0, kind: input, shape index: {}]
  %s1 = inlined_call_operand.hbm [shape: bf16[32,128], index: 1, kind: input, shape index: {}]
  %s2 = inlined_call_operand.hbm [shape: f32[1,128], index: 2, kind: input, shape index: {}]
  %s3 = inlined_call_operand.vmem [shape: bf16[128,32], index: 3, kind: input, shape index: {}]
  %s4 = inlined_call_operand.hbm [shape: f32[1,32], index: 4, kind: input, shape index: {}]
  %s5 = inlined_call_operand.hbm [shape: f32[32,256], index: 5, kind: input, shape index: {}]
  %s6 = inlined_call_operand.vmem [shape: f32[1,256], index: 6, kind: input, shape index: {}]
  %s7 = inlined_call_operand.vmem [shape: f32[16,32], index: 7, kind: output, shape index: {0}]
  %s8 = inlined_call_operand.vmem [shape: f32[16,256], index: 8, kind: output, shape index: {1}]
  %9 = xla_tuple %s7, %s8
  %s10 = sld [smem:[#allocation0]]
  $region62: #{ssma_forward.2} parent=0
    _
  %s12 = ssub.s32 1, %s10
  %s13 = scalar_select 0, %s12, %s10
  $region1: #{ssma_forward.2} parent=0
    #allocation2 [shape = 'u8[8192]{0}', space=vmem, size = 0x2000, scoped, tag = 'input window, operand 1, single buffered']
    #allocation3 [shape = 's32[1]{0}', space=sflag, size = 0x4, scoped, tag = 'scoped memory for ssma_forward.2']
    #allocation4 [shape = 'u8[512]{0}', space=vmem, size = 0x400, scoped, tag = 'input window, operand 2, single buffered']
    #allocation5 [shape = 's32[1]{0}', space=sflag, size = 0x4, scoped, tag = 'scoped memory for ssma_forward.2']
    #allocation6 [shape = 'u8[512]{0}', space=vmem, size = 0x400, scoped, tag = 'input window, operand 4, single buffered']
    #allocation7 [shape = 'u8[32768]{0}', space=vmem, size = 0x8000, scoped, tag = 'input window, operand 5, single buffered']
    #allocation8 [shape = 's32[1]{0}', space=sflag, size = 0x4, scoped, tag = 'scoped memory for ssma_forward.2']
    %14 = vsyncpa [#allocation3], 0
    %15 = vsyncpa [#allocation5], 0
    %16 = vsyncpa [#allocation8], 0
    // Predicated region
    $region2: #{ssma_forward.2} parent=1 // pred_check
      _
    $region3: #{ssma_forward.2} parent=1 // pred_check_branch
      %18 = sbr.rel (0) target = $region5
    $region4: #{ssma_forward.2} parent=1 // pred_region
      _
    $region5: #{ssma_forward.2} parent=1 // pred_fallthru
      _
    // Predicated region
    $region6: #{ssma_forward.2} parent=1 // pred_check
      _
    $region7: #{ssma_forward.2} parent=1 // pred_check_branch
      %20 = sbr.rel (0) target = $region9
    $region8: #{ssma_forward.2} parent=1 // pred_region
      %s22 = ssub.s32 256, 256
      %23 = vsyncadd [#allocation3], %s22
      %s24 = sshll.u32 [#allocation2], 4
      %s25 = int_to_ptr.vmem [resolvable:$true] %s24
      %30 = dma.hbm_to_vmem [thread:$0]  %s1, 256, %s25, [#allocation3], 64, 64, 4
    $region9: #{ssma_forward.2} parent=1 // pred_fallthru
      _
    // Predicated region
    $region10: #{ssma_forward.2} parent=1 // pred_check
      _
    $region11: #{ssma_forward.2} parent=1 // pred_check_branch
      %32 = sbr.rel (0) target = $region13
    $region12: #{ssma_forward.2} parent=1 // pred_region
      %s34 = ssub.s32 16, 16
      %35 = vsyncadd [#allocation5], %s34
      %s37 = sshll.u32 [#allocation4], 4
      %s38 = int_to_ptr.vmem [resolvable:$true] %s37
      %40 = dma.hbm_to_vmem [thread:$0]  %s2, 16, %s38, [#allocation5]
    $region13: #{ssma_forward.2} parent=1 // pred_fallthru
      _
    // Predicated region
    $region14: #{ssma_forward.2} parent=1 // pred_check
      _
    $region15: #{ssma_forward.2} parent=1 // pred_check_branch
      %42 = sbr.rel (0) target = $region17
    $region16: #{ssma_forward.2} parent=1 // pred_region
      _
    $region17: #{ssma_forward.2} parent=1 // pred_fallthru
      _
    // Predicated region
    $region18: #{ssma_forward.2} parent=1 // pred_check
      _
    $region19: #{ssma_forward.2} parent=1 // pred_check_branch
      %44 = sbr.rel (0) target = $region21
    $region20: #{ssma_forward.2} parent=1 // pred_region
      %s46 = ssub.s32 16, 16
      %47 = vsyncadd [#allocation5], %s46
      %s49 = sshll.u32 [#allocation6], 4
      %s50 = int_to_ptr.vmem [resolvable:$true] %s49
      %52 = dma.hbm_to_vmem [thread:$0]  %s4, 16, %s50, [#allocation5]
    $region21: #{ssma_forward.2} parent=1 // pred_fallthru
      _
    // Predicated region
    $region22: #{ssma_forward.2} parent=1 // pred_check
      _
    $region23: #{ssma_forward.2} parent=1 // pred_check_branch
      %54 = sbr.rel (0) target = $region25
    $region24: #{ssma_forward.2} parent=1 // pred_region
      %s56 = ssub.s32 1024, 1024
      %57 = vsyncadd [#allocation8], %s56
      %s58 = sshll.u32 [#allocation7], 4
      %s59 = int_to_ptr.vmem [resolvable:$true] %s58
      %64 = dma.hbm_to_vmem [thread:$0]  %s5, 1024, %s59, [#allocation8], 256, 256, 16
    $region25: #{ssma_forward.2} parent=1 // pred_fallthru
      _
    // Predicated region
    $region26: #{ssma_forward.2} parent=1 // pred_check
      _
    $region27: #{ssma_forward.2} parent=1 // pred_check_branch
      %66 = sbr.rel (0) target = $region29
    $region28: #{ssma_forward.2} parent=1 // pred_region
      _
    $region29: #{ssma_forward.2} parent=1 // pred_fallthru
      _
    // Predicated region
    $region30: #{ssma_forward.2} parent=1 // pred_check
      _
    $region31: #{ssma_forward.2} parent=1 // pred_check_branch
      %68 = sbr.rel (0) target = $region33
    $region32: #{ssma_forward.2} parent=1 // pred_region
      %69 = dma.done [#allocation3], 256
    $region33: #{ssma_forward.2} parent=1 // pred_fallthru
      _
    // Predicated region
    $region34: #{ssma_forward.2} parent=1 // pred_check
      _
    $region35: #{ssma_forward.2} parent=1 // pred_check_branch
      %71 = sbr.rel (0) target = $region37
    $region36: #{ssma_forward.2} parent=1 // pred_region
      %72 = dma.done [#allocation5], 16
    $region37: #{ssma_forward.2} parent=1 // pred_fallthru
      _
    // Predicated region
    $region38: #{ssma_forward.2} parent=1 // pred_check
      _
    $region39: #{ssma_forward.2} parent=1 // pred_check_branch
      %74 = sbr.rel (0) target = $region41
    $region40: #{ssma_forward.2} parent=1 // pred_region
      %75 = dma.done [#allocation5], 16
    $region41: #{ssma_forward.2} parent=1 // pred_fallthru
      _
    // Predicated region
    $region42: #{ssma_forward.2} parent=1 // pred_check
      _
    $region43: #{ssma_forward.2} parent=1 // pred_check_branch
      %77 = sbr.rel (0) target = $region45
    $region44: #{ssma_forward.2} parent=1 // pred_region
      %78 = dma.done [#allocation8], 1024
    $region45: #{ssma_forward.2} parent=1 // pred_fallthru
      _
    %v80 = vld [vmem:[%s0] sm:$0xff]
    %v81 = vld [vmem:[%s0 + $0x8] sm:$0xff]
    %v82 = vpack.c.bf16 %v81, %v80
    %v83 = vld [vmem:[#allocation2] sm:$0xf]
    %v84 = vld [vmem:[#allocation2 + $0x4] sm:$0xf]
    %v85 = vld [vmem:[#allocation2 + $0x8] sm:$0xf]
    %v86 = vld [vmem:[#allocation2 + $0xc] sm:$0xf]
    %v87 = vld [vmem:[#allocation4] sm:$0x1]
    %v89 = vlaneseq
    %v90 = vshrl.u32 %v89, 7
    %v91 = vsub.s32 0, %v90
    %v92 = vrot.slane %v87, %v91
    %v98 = vunpack.c.l.b16 %v83
    %v99 = vunpack.c.l.b16 %v84
    %v100 = vunpack.c.l.b16 %v85
    %v101 = vunpack.c.l.b16 %v86
    %v102 = vpack.c.b16 %v99, %v98
    %v103 = vpack.c.b16 %v101, %v100
    %vm106 = vcmask 261120
    %v108 = vsel %vm106, %v82, 0
    %110 = vmatprep.subr.bf16.mxu0 0
    %111 = vmatpush1.bf16.msra.mxu0 %v102
    %112 = vmatprep.subr.bf16.mxu0 0
    %113 = vmatpush1.bf16.msra.mxu0 %v103
    %114 = vmatprep.subr.bf16.mxu0 0
    %115 = vmatpush1.bf16.msra.mxu0 0
    %116 = vmatprep.subr.bf16.mxu0 0
    %117 = vmatpush1.bf16.msra.mxu0 0
    %118 = vmatprep.subr.bf16.mxu0 0
    %119 = vmatpush1.bf16.msra.mxu0 0
    %120 = vmatprep.subr.bf16.mxu0 0
    %121 = vmatpush1.bf16.msra.mxu0 0
    %122 = vmatprep.subr.bf16.mxu0 0
    %123 = vmatpush1.bf16.msra.mxu0 0
    %124 = vmatprep.subr.bf16.mxu0 0
    %125 = vmatpush1.bf16.msra.mxu0 0
    %126 = vmatprep.subr.bf16.mxu0 0
    %127 = vmatpush1.bf16.msra.mxu0 0
    %128 = vmatprep.subr.bf16.mxu0 0
    %129 = vmatpush1.bf16.msra.mxu0 0
    %130 = vmatprep.subr.bf16.mxu0 0
    %131 = vmatpush1.bf16.msra.mxu0 0
    %132 = vmatprep.subr.bf16.mxu0 0
    %133 = vmatpush1.bf16.msra.mxu0 0
    %134 = vmatprep.subr.bf16.mxu0 0
    %135 = vmatpush1.bf16.msra.mxu0 0
    %136 = vmatprep.subr.bf16.mxu0 0
    %137 = vmatpush1.bf16.msra.mxu0 0
    %138 = vmatprep.subr.bf16.mxu0 0
    %139 = vmatpush1.bf16.msra.mxu0 0
    %140 = vmatprep.subr.bf16.mxu0 0
    %141 = vmatpush1.bf16.msra.mxu0 0
    %142 = vmatprep.mubr.bf16.mxu0 0
    %143 = vmatmul.mubr.bf16.gmra.mrb[0].mxu0 %v108
    %v144 = vpop.f32.mrb[0].mxu0
    %v145 = vadd.f32 %v92, %v144
    %v146 = vpop.f32.mrb[0].mxu0
    %v147 = vpop.f32.mrb[0].mxu0
    %v148 = vadd.f32 %v92, %v147
    %v149 = vpop.f32.mrb[0].mxu0
    %150 = vdwg.mxu0
    %v151 = vmax.f32 %v145, 0.0
    %v152 = vmax.f32 %v148, 0.0
    %v153 = vpack.c.bf16 %v152, %v151
    %v154 = vld [vmem:[%s3] sm:$0xf]
    %v155 = vld [vmem:[%s3 + $0x4] sm:$0xf]
    %v156 = vld [vmem:[%s3 + $0x8] sm:$0xf]
    %v157 = vld [vmem:[%s3 + $0xc] sm:$0xf]
    %v158 = vld [vmem:[%s3 + $0x10] sm:$0xf]
    %v159 = vld [vmem:[%s3 + $0x14] sm:$0xf]
    %v160 = vld [vmem:[%s3 + $0x18] sm:$0xf]
    %v161 = vld [vmem:[%s3 + $0x1c] sm:$0xf]
    %v162 = vld [vmem:[%s3 + $0x20] sm:$0xf]
    %v163 = vld [vmem:[%s3 + $0x24] sm:$0xf]
    %v164 = vld [vmem:[%s3 + $0x28] sm:$0xf]
    %v165 = vld [vmem:[%s3 + $0x2c] sm:$0xf]
    %v166 = vld [vmem:[%s3 + $0x30] sm:$0xf]
    %v167 = vld [vmem:[%s3 + $0x34] sm:$0xf]
    %v168 = vld [vmem:[%s3 + $0x38] sm:$0xf]
    %v169 = vld [vmem:[%s3 + $0x3c] sm:$0xf]
    %v170 = vld [vmem:[#allocation6] sm:$0x1]
    %v172 = vlaneseq
    %v173 = vshrl.u32 %v172, 7
    %v174 = vsub.s32 0, %v173
    %v175 = vrot.slane %v170, %v174
    %v193 = vunpack.c.l.b16 %v154
    %v194 = vunpack.c.l.b16 %v155
    %v195 = vunpack.c.l.b16 %v156
    %v196 = vunpack.c.l.b16 %v157
    %v197 = vunpack.c.l.b16 %v158
    %v198 = vunpack.c.l.b16 %v159
    %v199 = vunpack.c.l.b16 %v160
    %v200 = vunpack.c.l.b16 %v161
    %v201 = vunpack.c.l.b16 %v162
    %v202 = vunpack.c.l.b16 %v163
    %v203 = vunpack.c.l.b16 %v164
    %v204 = vunpack.c.l.b16 %v165
    %v205 = vunpack.c.l.b16 %v166
    %v206 = vunpack.c.l.b16 %v167
    %v207 = vunpack.c.l.b16 %v168
    %v208 = vunpack.c.l.b16 %v169
    %v209 = vpack.c.b16 %v194, %v193
    %v210 = vpack.c.b16 %v196, %v195
    %v211 = vpack.c.b16 %v198, %v197
    %v212 = vpack.c.b16 %v200, %v199
    %v213 = vpack.c.b16 %v202, %v201
    %v214 = vpack.c.b16 %v204, %v203
    %v215 = vpack.c.b16 %v206, %v205
    %v216 = vpack.c.b16 %v208, %v207
    %225 = vmatprep.subr.bf16.mxu0 0
    %226 = vmatpush1.bf16.msra.mxu0 %v209
    %227 = vmatprep.subr.bf16.mxu0 0
    %228 = vmatpush1.bf16.msra.mxu0 %v210
    %229 = vmatprep.subr.bf16.mxu0 0
    %230 = vmatpush1.bf16.msra.mxu0 %v211
    %231 = vmatprep.subr.bf16.mxu0 0
    %232 = vmatpush1.bf16.msra.mxu0 %v212
    %233 = vmatprep.subr.bf16.mxu0 0
    %234 = vmatpush1.bf16.msra.mxu0 %v213
    %235 = vmatprep.subr.bf16.mxu0 0
    %236 = vmatpush1.bf16.msra.mxu0 %v214
    %237 = vmatprep.subr.bf16.mxu0 0
    %238 = vmatpush1.bf16.msra.mxu0 %v215
    %239 = vmatprep.subr.bf16.mxu0 0
    %240 = vmatpush1.bf16.msra.mxu0 %v216
    %241 = vmatprep.subr.bf16.mxu0 0
    %242 = vmatpush1.bf16.msra.mxu0 0
    %243 = vmatprep.subr.bf16.mxu0 0
    %244 = vmatpush1.bf16.msra.mxu0 0
    %245 = vmatprep.subr.bf16.mxu0 0
    %246 = vmatpush1.bf16.msra.mxu0 0
    %247 = vmatprep.subr.bf16.mxu0 0
    %248 = vmatpush1.bf16.msra.mxu0 0
    %249 = vmatprep.subr.bf16.mxu0 0
    %250 = vmatpush1.bf16.msra.mxu0 0
    %251 = vmatprep.subr.bf16.mxu0 0
    %252 = vmatpush1.bf16.msra.mxu0 0
    %253 = vmatprep.subr.bf16.mxu0 0
    %254 = vmatpush1.bf16.msra.mxu0 0
    %255 = vmatprep.subr.bf16.mxu0 0
    %256 = vmatpush1.bf16.msra.mxu0 0
    %257 = vmatprep.mubr.bf16.mxu0 0
    %258 = vmatmul.mubr.bf16.gmra.mrb[0].mxu0 %v153
    %v259 = vpop.f32.mrb[0].mxu0
    %v260 = vadd.f32 %v175, %v259
    %v261 = vpop.f32.mrb[0].mxu0
    %v262 = vpop.f32.mrb[0].mxu0
    %v263 = vadd.f32 %v175, %v262
    %v264 = vpop.f32.mrb[0].mxu0
    %265 = vdwg.mxu0
    %v266 = vadd.f32 %v80, %v260
    %v267 = vadd.f32 %v81, %v263
    %268 = vst.msk [vmem:[%s7] sm:$0xff] %vm106, %v266
    %269 = vst.msk [vmem:[%s7 + $0x8] sm:$0xff] %vm106, %v267
    %v270 = vld [vmem:[#allocation7] sm:$0xff]
    %v271 = vld [vmem:[#allocation7 + $0x8] sm:$0xff]
    %v272 = vld [vmem:[#allocation7 + $0x10] sm:$0xff]
    %v273 = vld [vmem:[#allocation7 + $0x18] sm:$0xff]
    %v274 = vld [vmem:[#allocation7 + $0x20] sm:$0xff]
    %v275 = vld [vmem:[#allocation7 + $0x28] sm:$0xff]
    %v276 = vld [vmem:[#allocation7 + $0x30] sm:$0xff]
    %v277 = vld [vmem:[#allocation7 + $0x38] sm:$0xff]
    %v278 = vld [vmem:[%s6] sm:$0x3]
    %v280 = vlaneseq
    %v281 = vshrl.u32 %v280, 7
    %v282 = vsub.s32 0, %v281
    %v283 = vrot.slane %v278, %v282
    %v284 = vlaneseq
    %v285 = vshrl.u32 %v284, 7
    %v286 = vsub.s32 1, %v285
    %v287 = vrot.slane %v278, %v286
    %v291 = vsel %vm106, %v80, 0
    %v294 = vsel %vm106, %v81, 0
    %296 = vmatprep.subr.mxu0 %v271
    %297 = vmatpush1.msra.mxu0 %v270
    %298 = vmatprep.subr.mxu0 %v273
    %299 = vmatpush1.msra.mxu0 %v272
    %300 = vmatprep.subr.mxu0 %v275
    %301 = vmatpush1.msra.mxu0 %v274
    %302 = vmatprep.subr.mxu0 %v277
    %303 = vmatpush1.msra.mxu0 %v276
    %304 = vmatprep.subr.mxu0 0.0
    %305 = vmatpush1.msra.mxu0 0.0
    %306 = vmatprep.subr.mxu0 0.0
    %307 = vmatpush1.msra.mxu0 0.0
    %308 = vmatprep.subr.mxu0 0.0
    %309 = vmatpush1.msra.mxu0 0.0
    %310 = vmatprep.subr.mxu0 0.0
    %311 = vmatpush1.msra.mxu0 0.0
    %312 = vmatprep.subr.mxu0 0.0
    %313 = vmatpush1.msra.mxu0 0.0
    %314 = vmatprep.subr.mxu0 0.0
    %315 = vmatpush1.msra.mxu0 0.0
    %316 = vmatprep.subr.mxu0 0.0
    %317 = vmatpush1.msra.mxu0 0.0
    %318 = vmatprep.subr.mxu0 0.0
    %319 = vmatpush1.msra.mxu0 0.0
    %320 = vmatprep.subr.mxu0 0.0
    %321 = vmatpush1.msra.mxu0 0.0
    %322 = vmatprep.subr.mxu0 0.0
    %323 = vmatpush1.msra.mxu0 0.0
    %324 = vmatprep.subr.mxu0 0.0
    %325 = vmatpush1.msra.mxu0 0.0
    %326 = vmatprep.subr.mxu0 0.0
    %327 = vmatpush1.msra.mxu0 0.0
    %328 = vmatprep.subr.mxu0 0.0
    %329 = vmatpush1.msra.mxu0 0.0
    %330 = vmatprep.subr.mxu0 0.0
    %331 = vmatpush1.msra.mxu0 0.0
    %332 = vmatprep.subr.mxu0 0.0
    %333 = vmatpush1.msra.mxu0 0.0
    %334 = vmatprep.subr.mxu0 0.0
    %335 = vmatpush1.msra.mxu0 0.0
    %336 = vmatprep.subr.mxu0 0.0
    %337 = vmatpush1.msra.mxu0 0.0
    %338 = vmatprep.subr.mxu0 0.0
    %339 = vmatpush1.msra.mxu0 0.0
    %340 = vmatprep.subr.mxu0 0.0
    %341 = vmatpush1.msra.mxu0 0.0
    %342 = vmatprep.subr.mxu0 0.0
    %343 = vmatpush1.msra.mxu0 0.0
    %344 = vmatprep.subr.mxu0 0.0
    %345 = vmatpush1.msra.mxu0 0.0
    %346 = vmatprep.subr.mxu0 0.0
    %347 = vmatpush1.msra.mxu0 0.0
    %348 = vmatprep.subr.mxu0 0.0
    %349 = vmatpush1.msra.mxu0 0.0
    %350 = vmatprep.subr.mxu0 0.0
    %351 = vmatpush1.msra.mxu0 0.0
    %352 = vmatprep.subr.mxu0 0.0
    %353 = vmatpush1.msra.mxu0 0.0
    %354 = vmatprep.subr.mxu0 0.0
    %355 = vmatpush1.msra.mxu0 0.0
    %356 = vmatprep.subr.mxu0 0.0
    %357 = vmatpush1.msra.mxu0 0.0
    %358 = vmatprep.subr.mxu0 0.0
    %359 = vmatpush1.msra.mxu0 0.0
    %360 = vmatprep.mubr.f32.mxu0 0.0
    %361 = vmatmul.mubr.f32.gmra.mrb[0].mxu0 %v291
    %v362 = vpop.f32.mrb[0].mxu0
    %v363 = vadd.f32 %v283, %v362
    %v364 = vpop.f32.mrb[0].mxu0
    %v365 = vadd.f32 %v287, %v364
    %366 = vmatprep.mubr.f32.mxu0 0.0
    %367 = vmatmul.mubr.f32.gmra.mrb[0].mxu0 %v294
    %v368 = vpop.f32.mrb[0].mxu0
    %v369 = vadd.f32 %v283, %v368
    %v370 = vpop.f32.mrb[0].mxu0
    %v371 = vadd.f32 %v287, %v370
    %372 = vdwg.mxu0
    %373 = vst [vmem:[%s8] sm:$0xff] %v363
    %374 = vst [vmem:[%s8 + $0x8] sm:$0xff] %v365
    %375 = vst [vmem:[%s8 + $0x10] sm:$0xff] %v369
    %376 = vst [vmem:[%s8 + $0x18] sm:$0xff] %v371
    // Predicated region
    $region46: #{ssma_forward.2} parent=1 // pred_check
      _
    $region47: #{ssma_forward.2} parent=1 // pred_check_branch
      %378 = sbr.rel (0) target = $region49
    $region48: #{ssma_forward.2} parent=1 // pred_region
      _
    $region49: #{ssma_forward.2} parent=1 // pred_fallthru
      _
    // Predicated region
    $region50: #{ssma_forward.2} parent=1 // pred_check
      _
    $region51: #{ssma_forward.2} parent=1 // pred_check_branch
      %380 = sbr.rel (0) target = $region53
    $region52: #{ssma_forward.2} parent=1 // pred_region
      _
    $region53: #{ssma_forward.2} parent=1 // pred_fallthru
      _
    // Predicated region
    $region54: #{ssma_forward.2} parent=1 // pred_check
      _
    $region55: #{ssma_forward.2} parent=1 // pred_check_branch
      %382 = sbr.rel (0) target = $region57
    $region56: #{ssma_forward.2} parent=1 // pred_region
      _
    $region57: #{ssma_forward.2} parent=1 // pred_fallthru
      _
    // Predicated region
    $region58: #{ssma_forward.2} parent=1 // pred_check
      _
    $region59: #{ssma_forward.2} parent=1 // pred_check_branch
      %384 = sbr.rel (0) target = $region61
    $region60: #{ssma_forward.2} parent=1 // pred_region
      _
    $region61: #{ssma_forward.2} parent=1 // pred_fallthru
      _
    %385 = vsyncpa [#allocation3], 1
    %386 = vsyncpa [#allocation5], 1
    %387 = vsyncpa [#allocation8], 1

// kernel: ssma_forward.3
$region0: #{ssma_forward.3}
  #allocation0 [shape = 'u32[]', space=smem, size = 0x4, offset = 0x4, fixed_abs, tag = 'smem constant byte address 0x4 - core index']
  #allocation1 [shape = 'u32[144,128]{1,0:T(1,128)}', space=vmem, size = 0x12000, scoped, tag = 'internal scratch']
  #allocation2 [shape = 'f32[8,256]{1,0:T(8,128)}', space=vmem, size = 0x2000, scoped, tag = 'scratch operand']
  #allocation3 [shape = 'f32[8,256]{1,0:T(8,128)}', space=vmem, size = 0x2000, scoped, tag = 'scratch operand']
  #allocation4 [shape = 'f32[1,1]{1,0:T(1,128)S(6)}', space=smem, size = 0x200, scoped, tag = 'scoped memory for ssma_forward.3']
  %s0 = inlined_call_operand.<no memory space> [shape: f32[1,1], index: 0, kind: input, shape index: {}]
  %s1 = inlined_call_operand.vmem [shape: f32[8,8,256], index: 1, kind: input, shape index: {}]
  %s2 = inlined_call_operand.vmem [shape: f32[256,256], index: 2, kind: input, shape index: {}]
  %s3 = inlined_call_operand.vmem [shape: f32[8,256], index: 3, kind: output, shape index: {}]
  %s4 = sld [smem:[#allocation0]]
  $region37: #{ssma_forward.3} parent=0
    _
  %s6 = ssub.s32 1, %s4
  %s7 = scalar_select 0, %s6, %s4
  %8 = sst [smem:[#allocation4]] %s0
  // Predicated region
  $region2: #{ssma_forward.3} parent=0 // pred_check
    _
  $region3: #{ssma_forward.3} parent=0 // pred_check_branch
    %10 = sbr.rel (0) target = $region5
  $region4: #{ssma_forward.3} parent=0 // pred_region
    _
  $region5: #{ssma_forward.3} parent=0 // pred_fallthru
    _
  // Predicated region
  $region6: #{ssma_forward.3} parent=0 // pred_check
    _
  $region7: #{ssma_forward.3} parent=0 // pred_check_branch
    %12 = sbr.rel (0) target = $region9
  $region8: #{ssma_forward.3} parent=0 // pred_region
    _
  $region9: #{ssma_forward.3} parent=0 // pred_fallthru
    _
  // Predicated region
  $region10: #{ssma_forward.3} parent=0 // pred_check
    _
  $region11: #{ssma_forward.3} parent=0 // pred_check_branch
    %14 = sbr.rel (0) target = $region13
  $region12: #{ssma_forward.3} parent=0 // pred_region
    _
  $region13: #{ssma_forward.3} parent=0 // pred_fallthru
    _
  %p15 = scmp.eq.s32.totalorder 0, 0
  // Predicated region
  $region14: #{ssma_forward.3} parent=0 // pred_check
    %p16 = pneg %p15
  $region15: #{ssma_forward.3} parent=0 // pred_check_branch
    %18 = sbr.rel (%p16) target = $region17
  $region16: #{ssma_forward.3} parent=0 // pred_region
    %19 = vst [vmem:[#allocation2] sm:$0xff] 0.0
    %20 = vst [vmem:[#allocation2 + $0x8] sm:$0xff] 0.0
    %21 = vst [vmem:[#allocation3] sm:$0xff] 0.0
    %22 = vst [vmem:[#allocation3 + $0x8] sm:$0xff] 0.0
  $region17: #{ssma_forward.3} parent=0 // pred_fallthru
    _
  %s23 = sld [smem:[#allocation4]]
  %v24 = vld [vmem:[%s2] sm:$0xff]
  %v25 = vld [vmem:[%s2 + $0x8] sm:$0xff]
  %v26 = vld [vmem:[%s2 + $0x10] sm:$0xff]
  %v27 = vld [vmem:[%s2 + $0x18] sm:$0xff]
  %v28 = vld [vmem:[%s2 + $0x20] sm:$0xff]
  %v29 = vld [vmem:[%s2 + $0x28] sm:$0xff]
  %v30 = vld [vmem:[%s2 + $0x30] sm:$0xff]
  %v31 = vld [vmem:[%s2 + $0x38] sm:$0xff]
  %v32 = vld [vmem:[%s2 + $0x40] sm:$0xff]
  %v33 = vld [vmem:[%s2 + $0x48] sm:$0xff]
  %v34 = vld [vmem:[%s2 + $0x50] sm:$0xff]
  %v35 = vld [vmem:[%s2 + $0x58] sm:$0xff]
  %v36 = vld [vmem:[%s2 + $0x60] sm:$0xff]
  %v37 = vld [vmem:[%s2 + $0x68] sm:$0xff]
  %v38 = vld [vmem:[%s2 + $0x70] sm:$0xff]
  %v39 = vld [vmem:[%s2 + $0x78] sm:$0xff]
  %v40 = vld [vmem:[%s2 + $0x80] sm:$0xff]
  %v41 = vld [vmem:[%s2 + $0x88] sm:$0xff]
  %v42 = vld [vmem:[%s2 + $0x90] sm:$0xff]
  %v43 = vld [vmem:[%s2 + $0x98] sm:$0xff]
  %v44 = vld [vmem:[%s2 + $0xa0] sm:$0xff]
  %v45 = vld [vmem:[%s2 + $0xa8] sm:$0xff]
  %v46 = vld [vmem:[%s2 + $0xb0] sm:$0xff]
  %v47 = vld [vmem:[%s2 + $0xb8] sm:$0xff]
  %v48 = vld [vmem:[%s2 + $0xc0] sm:$0xff]
  %v49 = vld [vmem:[%s2 + $0xc8] sm:$0xff]
  %v50 = vld [vmem:[%s2 + $0xd0] sm:$0xff]
  %v51 = vld [vmem:[%s2 + $0xd8] sm:$0xff]
  %v52 = vld [vmem:[%s2 + $0xe0] sm:$0xff]
  %v53 = vld [vmem:[%s2 + $0xe8] sm:$0xff]
  %v54 = vld [vmem:[%s2 + $0xf0] sm:$0xff]
  %v55 = vld [vmem:[%s2 + $0xf8] sm:$0xff]
  %v56 = vld [vmem:[%s2 + $0x100] sm:$0xff]
  %v57 = vld [vmem:[%s2 + $0x108] sm:$0xff]
  %v58 = vld [vmem:[%s2 + $0x110] sm:$0xff]
  %v59 = vld [vmem:[%s2 + $0x118] sm:$0xff]
  %v60 = vld [vmem:[%s2 + $0x120] sm:$0xff]
  %v61 = vld [vmem:[%s2 + $0x128] sm:$0xff]
  %v62 = vld [vmem:[%s2 + $0x130] sm:$0xff]
  %v63 = vld [vmem:[%s2 + $0x138] sm:$0xff]
  %v64 = vld [vmem:[%s2 + $0x140] sm:$0xff]
  %v65 = vld [vmem:[%s2 + $0x148] sm:$0xff]
  %v66 = vld [vmem:[%s2 + $0x150] sm:$0xff]
  %v67 = vld [vmem:[%s2 + $0x158] sm:$0xff]
  %v68 = vld [vmem:[%s2 + $0x160] sm:$0xff]
  %v69 = vld [vmem:[%s2 + $0x168] sm:$0xff]
  %v70 = vld [vmem:[%s2 + $0x170] sm:$0xff]
  %v71 = vld [vmem:[%s2 + $0x178] sm:$0xff]
  %v72 = vld [vmem:[%s2 + $0x180] sm:$0xff]
  %v73 = vld [vmem:[%s2 + $0x188] sm:$0xff]
  %v74 = vld [vmem:[%s2 + $0x190] sm:$0xff]
  %v75 = vld [vmem:[%s2 + $0x198] sm:$0xff]
  %v76 = vld [vmem:[%s2 + $0x1a0] sm:$0xff]
  %v77 = vld [vmem:[%s2 + $0x1a8] sm:$0xff]
  %v78 = vld [vmem:[%s2 + $0x1b0] sm:$0xff]
  %v79 = vld [vmem:[%s2 + $0x1b8] sm:$0xff]
  %v80 = vld [vmem:[%s2 + $0x1c0] sm:$0xff]
  %v81 = vld [vmem:[%s2 + $0x1c8] sm:$0xff]
  %v82 = vld [vmem:[%s2 + $0x1d0] sm:$0xff]
  %v83 = vld [vmem:[%s2 + $0x1d8] sm:$0xff]
  %v84 = vld [vmem:[%s2 + $0x1e0] sm:$0xff]
  %v85 = vld [vmem:[%s2 + $0x1e8] sm:$0xff]
  %v86 = vld [vmem:[%s2 + $0x1f0] sm:$0xff]
  %v87 = vld [vmem:[%s2 + $0x1f8] sm:$0xff]
  %v88 = vld [vmem:[#allocation2] sm:$0xff]
  %v89 = vld [vmem:[#allocation2 + $0x8] sm:$0xff]
  %v90 = vld [vmem:[#allocation3] sm:$0xff]
  %v91 = vld [vmem:[#allocation3 + $0x8] sm:$0xff]
  loop: start=0, step=1, limit=8
  $region18: #{ssma_forward.3} parent=0 // loop_pre_header
    _
  $region19: #{ssma_forward.3} parent=0 // loop_header
    %s93 = sphi 0, %s97
    %p94 = scmp.ge.s32.totalorder %s93, 8
    %v98 = vphi %v88, %v723
    %v99 = vphi %v89, %v724
    %v100 = vphi %v90, %v732
    %v101 = vphi %v91, %v733
  $region20: #{ssma_forward.3} parent=0 // loop_header_branch
    %96 = sbr.rel (%p94) target = $region24
  $region21: #{ssma_forward.3} parent=0 // loop_body
    %s102 = smul.u32 %s93, 2
    %s103 = smul.addr %s102, 8
    %s104 = scalar_lea.vmem %s1, %s103
    %v105 = vld [vmem:[%s104] sm:$0xff]
    %v106 = vld [vmem:[%s104 + $0x8] sm:$0xff]
    %107 = vmatprep.subr.mxu0 %v25
    %108 = vmatpush1.msra.mxu0 %v24
    %109 = vmatprep.subr.mxu0 %v27
    %110 = vmatpush1.msra.mxu0 %v26
    %111 = vmatprep.subr.mxu0 %v29
    %112 = vmatpush1.msra.mxu0 %v28
    %113 = vmatprep.subr.mxu0 %v31
    %114 = vmatpush1.msra.mxu0 %v30
    %115 = vmatprep.subr.mxu0 %v33
    %116 = vmatpush1.msra.mxu0 %v32
    %117 = vmatprep.subr.mxu0 %v35
    %118 = vmatpush1.msra.mxu0 %v34
    %119 = vmatprep.subr.mxu0 %v37
    %120 = vmatpush1.msra.mxu0 %v36
    %121 = vmatprep.subr.mxu0 %v39
    %122 = vmatpush1.msra.mxu0 %v38
    %123 = vmatprep.subr.mxu0 %v41
    %124 = vmatpush1.msra.mxu0 %v40
    %125 = vmatprep.subr.mxu0 %v43
    %126 = vmatpush1.msra.mxu0 %v42
    %127 = vmatprep.subr.mxu0 %v45
    %128 = vmatpush1.msra.mxu0 %v44
    %129 = vmatprep.subr.mxu0 %v47
    %130 = vmatpush1.msra.mxu0 %v46
    %131 = vmatprep.subr.mxu0 %v49
    %132 = vmatpush1.msra.mxu0 %v48
    %133 = vmatprep.subr.mxu0 %v51
    %134 = vmatpush1.msra.mxu0 %v50
    %135 = vmatprep.subr.mxu0 %v53
    %136 = vmatpush1.msra.mxu0 %v52
    %137 = vmatprep.subr.mxu0 %v55
    %138 = vmatpush1.msra.mxu0 %v54
    %139 = vmatprep.subr.mxu0 %v57
    %140 = vmatpush1.msra.mxu0 %v56
    %141 = vmatprep.subr.mxu0 %v59
    %142 = vmatpush1.msra.mxu0 %v58
    %143 = vmatprep.subr.mxu0 %v61
    %144 = vmatpush1.msra.mxu0 %v60
    %145 = vmatprep.subr.mxu0 %v63
    %146 = vmatpush1.msra.mxu0 %v62
    %147 = vmatprep.subr.mxu0 %v65
    %148 = vmatpush1.msra.mxu0 %v64
    %149 = vmatprep.subr.mxu0 %v67
    %150 = vmatpush1.msra.mxu0 %v66
    %151 = vmatprep.subr.mxu0 %v69
    %152 = vmatpush1.msra.mxu0 %v68
    %153 = vmatprep.subr.mxu0 %v71
    %154 = vmatpush1.msra.mxu0 %v70
    %155 = vmatprep.subr.mxu0 %v73
    %156 = vmatpush1.msra.mxu0 %v72
    %157 = vmatprep.subr.mxu0 %v75
    %158 = vmatpush1.msra.mxu0 %v74
    %159 = vmatprep.subr.mxu0 %v77
    %160 = vmatpush1.msra.mxu0 %v76
    %161 = vmatprep.subr.mxu0 %v79
    %162 = vmatpush1.msra.mxu0 %v78
    %163 = vmatprep.subr.mxu0 %v81
    %164 = vmatpush1.msra.mxu0 %v80
    %165 = vmatprep.subr.mxu0 %v83
    %166 = vmatpush1.msra.mxu0 %v82
    %167 = vmatprep.subr.mxu0 %v85
    %168 = vmatpush1.msra.mxu0 %v84
    %169 = vmatprep.subr.mxu0 %v87
    %170 = vmatpush1.msra.mxu0 %v86
    %171 = vmatprep.mubr.f32.mxu0 %v99
    %172 = vmatmul.mubr.f32.gmra.mrb[0].mxu0 %v98
    %v173 = vpop.f32.mrb[0].mxu0
    %v174 = vadd.f32 %v105, %v173
    %v175 = vpop.f32.mrb[0].mxu0
    %v176 = vadd.f32 %v106, %v175
    %177 = vdwg.mxu0
    %v178 = vmax.f32 %v174, 0.0
    %v179 = vmax.f32 %v176, 0.0
    %v180 = vmax.f32 %v178, %v179
    %181 = vmax.xlane.f32.xlu0 %v180
    %v182 = vpop.xlane.xlu0 %181
    %vm183 = vcmp.ge.f32.partialorder %v178, %v182
    %vm184 = vcmp.ge.f32.partialorder %v179, %v182
    %v185 = vsel %vm183, -inf, %v178
    %v186 = vsel %vm184, -inf, %v179
    %v187 = vsel %vm183, 1, 0
    %v188 = vsel %vm184, 1, 0
    %v189 = vcvt.s32.f32 %v187
    %v190 = vcvt.s32.f32 %v188
    %v191 = vadd.f32 %v189, %v190
    %192 = vadd.xlane.f32.xlu0 %v191
    %v193 = vpop.xlane.xlu0 %192
    %vm194 = vcmp.ge.f32.partialorder %v193, 32.0
    %v195 = vsel %vm194, %v182, -inf
    %v196 = vmax.f32 %v185, %v186
    %197 = vmax.xlane.f32.xlu0 %v196
    %v198 = vpop.xlane.xlu0 %197
    %vm199 = vcmp.ge.f32.partialorder %v178, %v198
    %vm200 = vcmp.ge.f32.partialorder %v179, %v198
    %v201 = vsel %vm199, -inf, %v178
    %v202 = vsel %vm200, -inf, %v179
    %v203 = vsel %vm199, 1, 0
    %v204 = vsel %vm200, 1, 0
    %v205 = vcvt.s32.f32 %v203
    %v206 = vcvt.s32.f32 %v204
    %v207 = vadd.f32 %v205, %v206
    %208 = vadd.xlane.f32.xlu0 %v207
    %v209 = vpop.xlane.xlu0 %208
    %vm210 = vcmp.ge.f32.partialorder %v209, 32.0
    %v211 = vsel %vm210, %v198, -inf
    %v212 = vmax.f32 %v195, %v211
    %v213 = vmax.f32 %v201, %v202
    %214 = vmax.xlane.f32.xlu0 %v213
    %v215 = vpop.xlane.xlu0 %214
    %vm216 = vcmp.ge.f32.partialorder %v178, %v215
    %vm217 = vcmp.ge.f32.partialorder %v179, %v215
    %v218 = vsel %vm216, -inf, %v178
    %v219 = vsel %vm217, -inf, %v179
    %v220 = vsel %vm216, 1, 0
    %v221 = vsel %vm217, 1, 0
    %v222 = vcvt.s32.f32 %v220
    %v223 = vcvt.s32.f32 %v221
    %v224 = vadd.f32 %v222, %v223
    %225 = vadd.xlane.f32.xlu0 %v224
    %v226 = vpop.xlane.xlu0 %225
    %vm227 = vcmp.ge.f32.partialorder %v226, 32.0
    %v228 = vsel %vm227, %v215, -inf
    %v229 = vmax.f32 %v212, %v228
    %v230 = vmax.f32 %v218, %v219
    %231 = vmax.xlane.f32.xlu0 %v230
    %v232 = vpop.xlane.xlu0 %231
    %vm233 = vcmp.ge.f32.partialorder %v178, %v232
    %vm234 = vcmp.ge.f32.partialorder %v179, %v232
    %v235 = vsel %vm233, -inf, %v178
    %v236 = vsel %vm234, -inf, %v179
    %v237 = vsel %vm233, 1, 0
    %v238 = vsel %vm234, 1, 0
    %v239 = vcvt.s32.f32 %v237
    %v240 = vcvt.s32.f32 %v238
    %v241 = vadd.f32 %v239, %v240
    %242 = vadd.xlane.f32.xlu0 %v241
    %v243 = vpop.xlane.xlu0 %242
    %vm244 = vcmp.ge.f32.partialorder %v243, 32.0
    %v245 = vsel %vm244, %v232, -inf
    %v246 = vmax.f32 %v229, %v245
    %v247 = vmax.f32 %v235, %v236
    %248 = vmax.xlane.f32.xlu0 %v247
    %v249 = vpop.xlane.xlu0 %248
    %vm250 = vcmp.ge.f32.partialorder %v178, %v249
    %vm251 = vcmp.ge.f32.partialorder %v179, %v249
    %v252 = vsel %vm250, -inf, %v178
    %v253 = vsel %vm251, -inf, %v179
    %v254 = vsel %vm250, 1, 0
    %v255 = vsel %vm251, 1, 0
    %v256 = vcvt.s32.f32 %v254
    %v257 = vcvt.s32.f32 %v255
    %v258 = vadd.f32 %v256, %v257
    %259 = vadd.xlane.f32.xlu0 %v258
    %v260 = vpop.xlane.xlu0 %259
    %vm261 = vcmp.ge.f32.partialorder %v260, 32.0
    %v262 = vsel %vm261, %v249, -inf
    %v263 = vmax.f32 %v246, %v262
    %v264 = vmax.f32 %v252, %v253
    %265 = vmax.xlane.f32.xlu0 %v264
    %v266 = vpop.xlane.xlu0 %265
    %vm267 = vcmp.ge.f32.partialorder %v178, %v266
    %vm268 = vcmp.ge.f32.partialorder %v179, %v266
    %v269 = vsel %vm267, -inf, %v178
    %v270 = vsel %vm268, -inf, %v179
    %v271 = vsel %vm267, 1, 0
    %v272 = vsel %vm268, 1, 0
    %v273 = vcvt.s32.f32 %v271
    %v274 = vcvt.s32.f32 %v272
    %v275 = vadd.f32 %v273, %v274
    %276 = vadd.xlane.f32.xlu0 %v275
    %v277 = vpop.xlane.xlu0 %276
    %vm278 = vcmp.ge.f32.partialorder %v277, 32.0
    %v279 = vsel %vm278, %v266, -inf
    %v280 = vmax.f32 %v263, %v279
    %v281 = vmax.f32 %v269, %v270
    %282 = vmax.xlane.f32.xlu0 %v281
    %v283 = vpop.xlane.xlu0 %282
    %vm284 = vcmp.ge.f32.partialorder %v178, %v283
    %vm285 = vcmp.ge.f32.partialorder %v179, %v283
    %v286 = vsel %vm284, -inf, %v178
    %v287 = vsel %vm285, -inf, %v179
    %v288 = vsel %vm284, 1, 0
    %v289 = vsel %vm285, 1, 0
    %v290 = vcvt.s32.f32 %v288
    %v291 = vcvt.s32.f32 %v289
    %v292 = vadd.f32 %v290, %v291
    %293 = vadd.xlane.f32.xlu0 %v292
    %v294 = vpop.xlane.xlu0 %293
    %vm295 = vcmp.ge.f32.partialorder %v294, 32.0
    %v296 = vsel %vm295, %v283, -inf
    %v297 = vmax.f32 %v280, %v296
    %v298 = vmax.f32 %v286, %v287
    %299 = vmax.xlane.f32.xlu0 %v298
    %v300 = vpop.xlane.xlu0 %299
    %vm301 = vcmp.ge.f32.partialorder %v178, %v300
    %vm302 = vcmp.ge.f32.partialorder %v179, %v300
    %v303 = vsel %vm301, -inf, %v178
    %v304 = vsel %vm302, -inf, %v179
    %v305 = vsel %vm301, 1, 0
    %v306 = vsel %vm302, 1, 0
    %v307 = vcvt.s32.f32 %v305
    %v308 = vcvt.s32.f32 %v306
    %v309 = vadd.f32 %v307, %v308
    %310 = vadd.xlane.f32.xlu0 %v309
    %v311 = vpop.xlane.xlu0 %310
    %vm312 = vcmp.ge.f32.partialorder %v311, 32.0
    %v313 = vsel %vm312, %v300, -inf
    %v314 = vmax.f32 %v297, %v313
    %v315 = vmax.f32 %v303, %v304
    %316 = vmax.xlane.f32.xlu0 %v315
    %v317 = vpop.xlane.xlu0 %316
    %vm318 = vcmp.ge.f32.partialorder %v178, %v317
    %vm319 = vcmp.ge.f32.partialorder %v179, %v317
    %v320 = vsel %vm318, -inf, %v178
    %v321 = vsel %vm319, -inf, %v179
    %v322 = vsel %vm318, 1, 0
    %v323 = vsel %vm319, 1, 0
    %v324 = vcvt.s32.f32 %v322
    %v325 = vcvt.s32.f32 %v323
    %v326 = vadd.f32 %v324, %v325
    %327 = vadd.xlane.f32.xlu0 %v326
    %v328 = vpop.xlane.xlu0 %327
    %vm329 = vcmp.ge.f32.partialorder %v328, 32.0
    %v330 = vsel %vm329, %v317, -inf
    %v331 = vmax.f32 %v314, %v330
    %v332 = vmax.f32 %v320, %v321
    %333 = vmax.xlane.f32.xlu0 %v332
    %v334 = vpop.xlane.xlu0 %333
    %vm335 = vcmp.ge.f32.partialorder %v178, %v334
    %vm336 = vcmp.ge.f32.partialorder %v179, %v334
    %v337 = vsel %vm335, -inf, %v178
    %v338 = vsel %vm336, -inf, %v179
    %v339 = vsel %vm335, 1, 0
    %v340 = vsel %vm336, 1, 0
    %v341 = vcvt.s32.f32 %v339
    %v342 = vcvt.s32.f32 %v340
    %v343 = vadd.f32 %v341, %v342
    %344 = vadd.xlane.f32.xlu0 %v343
    %v345 = vpop.xlane.xlu0 %344
    %vm346 = vcmp.ge.f32.partialorder %v345, 32.0
    %v347 = vsel %vm346, %v334, -inf
    %v348 = vmax.f32 %v331, %v347
    %v349 = vmax.f32 %v337, %v338
    %350 = vmax.xlane.f32.xlu0 %v349
    %v351 = vpop.xlane.xlu0 %350
    %vm352 = vcmp.ge.f32.partialorder %v178, %v351
    %vm353 = vcmp.ge.f32.partialorder %v179, %v351
    %v354 = vsel %vm352, -inf, %v178
    %v355 = vsel %vm353, -inf, %v179
    %v356 = vsel %vm352, 1, 0
    %v357 = vsel %vm353, 1, 0
    %v358 = vcvt.s32.f32 %v356
    %v359 = vcvt.s32.f32 %v357
    %v360 = vadd.f32 %v358, %v359
    %361 = vadd.xlane.f32.xlu0 %v360
    %v362 = vpop.xlane.xlu0 %361
    %vm363 = vcmp.ge.f32.partialorder %v362, 32.0
    %v364 = vsel %vm363, %v351, -inf
    %v365 = vmax.f32 %v348, %v364
    %v366 = vmax.f32 %v354, %v355
    %367 = vmax.xlane.f32.xlu0 %v366
    %v368 = vpop.xlane.xlu0 %367
    %vm369 = vcmp.ge.f32.partialorder %v178, %v368
    %vm370 = vcmp.ge.f32.partialorder %v179, %v368
    %v371 = vsel %vm369, -inf, %v178
    %v372 = vsel %vm370, -inf, %v179
    %v373 = vsel %vm369, 1, 0
    %v374 = vsel %vm370, 1, 0
    %v375 = vcvt.s32.f32 %v373
    %v376 = vcvt.s32.f32 %v374
    %v377 = vadd.f32 %v375, %v376
    %378 = vadd.xlane.f32.xlu0 %v377
    %v379 = vpop.xlane.xlu0 %378
    %vm380 = vcmp.ge.f32.partialorder %v379, 32.0
    %v381 = vsel %vm380, %v368, -inf
    %v382 = vmax.f32 %v365, %v381
    %v383 = vmax.f32 %v371, %v372
    %384 = vmax.xlane.f32.xlu0 %v383
    %v385 = vpop.xlane.xlu0 %384
    %vm386 = vcmp.ge.f32.partialorder %v178, %v385
    %vm387 = vcmp.ge.f32.partialorder %v179, %v385
    %v388 = vsel %vm386, -inf, %v178
    %v389 = vsel %vm387, -inf, %v179
    %v390 = vsel %vm386, 1, 0
    %v391 = vsel %vm387, 1, 0
    %v392 = vcvt.s32.f32 %v390
    %v393 = vcvt.s32.f32 %v391
    %v394 = vadd.f32 %v392, %v393
    %395 = vadd.xlane.f32.xlu0 %v394
    %v396 = vpop.xlane.xlu0 %395
    %vm397 = vcmp.ge.f32.partialorder %v396, 32.0
    %v398 = vsel %vm397, %v385, -inf
    %v399 = vmax.f32 %v382, %v398
    %v400 = vmax.f32 %v388, %v389
    %401 = vmax.xlane.f32.xlu0 %v400
    %v402 = vpop.xlane.xlu0 %401
    %vm403 = vcmp.ge.f32.partialorder %v178, %v402
    %vm404 = vcmp.ge.f32.partialorder %v179, %v402
    %v405 = vsel %vm403, -inf, %v178
    %v406 = vsel %vm404, -inf, %v179
    %v407 = vsel %vm403, 1, 0
    %v408 = vsel %vm404, 1, 0
    %v409 = vcvt.s32.f32 %v407
    %v410 = vcvt.s32.f32 %v408
    %v411 = vadd.f32 %v409, %v410
    %412 = vadd.xlane.f32.xlu0 %v411
    %v413 = vpop.xlane.xlu0 %412
    %vm414 = vcmp.ge.f32.partialorder %v413, 32.0
    %v415 = vsel %vm414, %v402, -inf
    %v416 = vmax.f32 %v399, %v415
    %v417 = vmax.f32 %v405, %v406
    %418 = vmax.xlane.f32.xlu0 %v417
    %v419 = vpop.xlane.xlu0 %418
    %vm420 = vcmp.ge.f32.partialorder %v178, %v419
    %vm421 = vcmp.ge.f32.partialorder %v179, %v419
    %v422 = vsel %vm420, -inf, %v178
    %v423 = vsel %vm421, -inf, %v179
    %v424 = vsel %vm420, 1, 0
    %v425 = vsel %vm421, 1, 0
    %v426 = vcvt.s32.f32 %v424
    %v427 = vcvt.s32.f32 %v425
    %v428 = vadd.f32 %v426, %v427
    %429 = vadd.xlane.f32.xlu0 %v428
    %v430 = vpop.xlane.xlu0 %429
    %vm431 = vcmp.ge.f32.partialorder %v430, 32.0
    %v432 = vsel %vm431, %v419, -inf
    %v433 = vmax.f32 %v416, %v432
    %v434 = vmax.f32 %v422, %v423
    %435 = vmax.xlane.f32.xlu0 %v434
    %v436 = vpop.xlane.xlu0 %435
    %vm437 = vcmp.ge.f32.partialorder %v178, %v436
    %vm438 = vcmp.ge.f32.partialorder %v179, %v436
    %v439 = vsel %vm437, -inf, %v178
    %v440 = vsel %vm438, -inf, %v179
    %v441 = vsel %vm437, 1, 0
    %v442 = vsel %vm438, 1, 0
    %v443 = vcvt.s32.f32 %v441
    %v444 = vcvt.s32.f32 %v442
    %v445 = vadd.f32 %v443, %v444
    %446 = vadd.xlane.f32.xlu0 %v445
    %v447 = vpop.xlane.xlu0 %446
    %vm448 = vcmp.ge.f32.partialorder %v447, 32.0
    %v449 = vsel %vm448, %v436, -inf
    %v450 = vmax.f32 %v433, %v449
    %v451 = vmax.f32 %v439, %v440
    %452 = vmax.xlane.f32.xlu0 %v451
    %v453 = vpop.xlane.xlu0 %452
    %vm454 = vcmp.ge.f32.partialorder %v178, %v453
    %vm455 = vcmp.ge.f32.partialorder %v179, %v453
    %v456 = vsel %vm454, -inf, %v178
    %v457 = vsel %vm455, -inf, %v179
    %v458 = vsel %vm454, 1, 0
    %v459 = vsel %vm455, 1, 0
    %v460 = vcvt.s32.f32 %v458
    %v461 = vcvt.s32.f32 %v459
    %v462 = vadd.f32 %v460, %v461
    %463 = vadd.xlane.f32.xlu0 %v462
    %v464 = vpop.xlane.xlu0 %463
    %vm465 = vcmp.ge.f32.partialorder %v464, 32.0
    %v466 = vsel %vm465, %v453, -inf
    %v467 = vmax.f32 %v450, %v466
    %v468 = vmax.f32 %v456, %v457
    %469 = vmax.xlane.f32.xlu0 %v468
    %v470 = vpop.xlane.xlu0 %469
    %vm471 = vcmp.ge.f32.partialorder %v178, %v470
    %vm472 = vcmp.ge.f32.partialorder %v179, %v470
    %v473 = vsel %vm471, -inf, %v178
    %v474 = vsel %vm472, -inf, %v179
    %v475 = vsel %vm471, 1, 0
    %v476 = vsel %vm472, 1, 0
    %v477 = vcvt.s32.f32 %v475
    %v478 = vcvt.s32.f32 %v476
    %v479 = vadd.f32 %v477, %v478
    %480 = vadd.xlane.f32.xlu0 %v479
    %v481 = vpop.xlane.xlu0 %480
    %vm482 = vcmp.ge.f32.partialorder %v481, 32.0
    %v483 = vsel %vm482, %v470, -inf
    %v484 = vmax.f32 %v467, %v483
    %v485 = vmax.f32 %v473, %v474
    %486 = vmax.xlane.f32.xlu0 %v485
    %v487 = vpop.xlane.xlu0 %486
    %vm488 = vcmp.ge.f32.partialorder %v178, %v487
    %vm489 = vcmp.ge.f32.partialorder %v179, %v487
    %v490 = vsel %vm488, -inf, %v178
    %v491 = vsel %vm489, -inf, %v179
    %v492 = vsel %vm488, 1, 0
    %v493 = vsel %vm489, 1, 0
    %v494 = vcvt.s32.f32 %v492
    %v495 = vcvt.s32.f32 %v493
    %v496 = vadd.f32 %v494, %v495
    %497 = vadd.xlane.f32.xlu0 %v496
    %v498 = vpop.xlane.xlu0 %497
    %vm499 = vcmp.ge.f32.partialorder %v498, 32.0
    %v500 = vsel %vm499, %v487, -inf
    %v501 = vmax.f32 %v484, %v500
    %v502 = vmax.f32 %v490, %v491
    %503 = vmax.xlane.f32.xlu0 %v502
    %v504 = vpop.xlane.xlu0 %503
    %vm505 = vcmp.ge.f32.partialorder %v178, %v504
    %vm506 = vcmp.ge.f32.partialorder %v179, %v504
    %v507 = vsel %vm505, -inf, %v178
    %v508 = vsel %vm506, -inf, %v179
    %v509 = vsel %vm505, 1, 0
    %v510 = vsel %vm506, 1, 0
    %v511 = vcvt.s32.f32 %v509
    %v512 = vcvt.s32.f32 %v510
    %v513 = vadd.f32 %v511, %v512
    %514 = vadd.xlane.f32.xlu0 %v513
    %v515 = vpop.xlane.xlu0 %514
    %vm516 = vcmp.ge.f32.partialorder %v515, 32.0
    %v517 = vsel %vm516, %v504, -inf
    %v518 = vmax.f32 %v501, %v517
    %v519 = vmax.f32 %v507, %v508
    %520 = vmax.xlane.f32.xlu0 %v519
    %v521 = vpop.xlane.xlu0 %520
    %vm522 = vcmp.ge.f32.partialorder %v178, %v521
    %vm523 = vcmp.ge.f32.partialorder %v179, %v521
    %v524 = vsel %vm522, -inf, %v178
    %v525 = vsel %vm523, -inf, %v179
    %v526 = vsel %vm522, 1, 0
    %v527 = vsel %vm523, 1, 0
    %v528 = vcvt.s32.f32 %v526
    %v529 = vcvt.s32.f32 %v527
    %v530 = vadd.f32 %v528, %v529
    %531 = vadd.xlane.f32.xlu0 %v530
    %v532 = vpop.xlane.xlu0 %531
    %vm533 = vcmp.ge.f32.partialorder %v532, 32.0
    %v534 = vsel %vm533, %v521, -inf
    %v535 = vmax.f32 %v518, %v534
    %v536 = vmax.f32 %v524, %v525
    %537 = vmax.xlane.f32.xlu0 %v536
    %v538 = vpop.xlane.xlu0 %537
    %vm539 = vcmp.ge.f32.partialorder %v178, %v538
    %vm540 = vcmp.ge.f32.partialorder %v179, %v538
    %v541 = vsel %vm539, -inf, %v178
    %v542 = vsel %vm540, -inf, %v179
    %v543 = vsel %vm539, 1, 0
    %v544 = vsel %vm540, 1, 0
    %v545 = vcvt.s32.f32 %v543
    %v546 = vcvt.s32.f32 %v544
    %v547 = vadd.f32 %v545, %v546
    %548 = vadd.xlane.f32.xlu0 %v547
    %v549 = vpop.xlane.xlu0 %548
    %vm550 = vcmp.ge.f32.partialorder %v549, 32.0
    %v551 = vsel %vm550, %v538, -inf
    %v552 = vmax.f32 %v535, %v551
    %v553 = vmax.f32 %v541, %v542
    %554 = vmax.xlane.f32.xlu0 %v553
    %v555 = vpop.xlane.xlu0 %554
    %vm556 = vcmp.ge.f32.partialorder %v178, %v555
    %vm557 = vcmp.ge.f32.partialorder %v179, %v555
    %v558 = vsel %vm556, -inf, %v178
    %v559 = vsel %vm557, -inf, %v179
    %v560 = vsel %vm556, 1, 0
    %v561 = vsel %vm557, 1, 0
    %v562 = vcvt.s32.f32 %v560
    %v563 = vcvt.s32.f32 %v561
    %v564 = vadd.f32 %v562, %v563
    %565 = vadd.xlane.f32.xlu0 %v564
    %v566 = vpop.xlane.xlu0 %565
    %vm567 = vcmp.ge.f32.partialorder %v566, 32.0
    %v568 = vsel %vm567, %v555, -inf
    %v569 = vmax.f32 %v552, %v568
    %v570 = vmax.f32 %v558, %v559
    %571 = vmax.xlane.f32.xlu0 %v570
    %v572 = vpop.xlane.xlu0 %571
    %vm573 = vcmp.ge.f32.partialorder %v178, %v572
    %vm574 = vcmp.ge.f32.partialorder %v179, %v572
    %v575 = vsel %vm573, -inf, %v178
    %v576 = vsel %vm574, -inf, %v179
    %v577 = vsel %vm573, 1, 0
    %v578 = vsel %vm574, 1, 0
    %v579 = vcvt.s32.f32 %v577
    %v580 = vcvt.s32.f32 %v578
    %v581 = vadd.f32 %v579, %v580
    %582 = vadd.xlane.f32.xlu0 %v581
    %v583 = vpop.xlane.xlu0 %582
    %vm584 = vcmp.ge.f32.partialorder %v583, 32.0
    %v585 = vsel %vm584, %v572, -inf
    %v586 = vmax.f32 %v569, %v585
    %v587 = vmax.f32 %v575, %v576
    %588 = vmax.xlane.f32.xlu0 %v587
    %v589 = vpop.xlane.xlu0 %588
    %vm590 = vcmp.ge.f32.partialorder %v178, %v589
    %vm591 = vcmp.ge.f32.partialorder %v179, %v589
    %v592 = vsel %vm590, -inf, %v178
    %v593 = vsel %vm591, -inf, %v179
    %v594 = vsel %vm590, 1, 0
    %v595 = vsel %vm591, 1, 0
    %v596 = vcvt.s32.f32 %v594
    %v597 = vcvt.s32.f32 %v595
    %v598 = vadd.f32 %v596, %v597
    %599 = vadd.xlane.f32.xlu0 %v598
    %v600 = vpop.xlane.xlu0 %599
    %vm601 = vcmp.ge.f32.partialorder %v600, 32.0
    %v602 = vsel %vm601, %v589, -inf
    %v603 = vmax.f32 %v586, %v602
    %v604 = vmax.f32 %v592, %v593
    %605 = vmax.xlane.f32.xlu0 %v604
    %v606 = vpop.xlane.xlu0 %605
    %vm607 = vcmp.ge.f32.partialorder %v178, %v606
    %vm608 = vcmp.ge.f32.partialorder %v179, %v606
    %v609 = vsel %vm607, -inf, %v178
    %v610 = vsel %vm608, -inf, %v179
    %v611 = vsel %vm607, 1, 0
    %v612 = vsel %vm608, 1, 0
    %v613 = vcvt.s32.f32 %v611
    %v614 = vcvt.s32.f32 %v612
    %v615 = vadd.f32 %v613, %v614
    %616 = vadd.xlane.f32.xlu0 %v615
    %v617 = vpop.xlane.xlu0 %616
    %vm618 = vcmp.ge.f32.partialorder %v617, 32.0
    %v619 = vsel %vm618, %v606, -inf
    %v620 = vmax.f32 %v603, %v619
    %v621 = vmax.f32 %v609, %v610
    %622 = vmax.xlane.f32.xlu0 %v621
    %v623 = vpop.xlane.xlu0 %622
    %vm624 = vcmp.ge.f32.partialorder %v178, %v623
    %vm625 = vcmp.ge.f32.partialorder %v179, %v623
    %v626 = vsel %vm624, -inf, %v178
    %v627 = vsel %vm625, -inf, %v179
    %v628 = vsel %vm624, 1, 0
    %v629 = vsel %vm625, 1, 0
    %v630 = vcvt.s32.f32 %v628
    %v631 = vcvt.s32.f32 %v629
    %v632 = vadd.f32 %v630, %v631
    %633 = vadd.xlane.f32.xlu0 %v632
    %v634 = vpop.xlane.xlu0 %633
    %vm635 = vcmp.ge.f32.partialorder %v634, 32.0
    %v636 = vsel %vm635, %v623, -inf
    %v637 = vmax.f32 %v620, %v636
    %v638 = vmax.f32 %v626, %v627
    %639 = vmax.xlane.f32.xlu0 %v638
    %v640 = vpop.xlane.xlu0 %639
    %vm641 = vcmp.ge.f32.partialorder %v178, %v640
    %vm642 = vcmp.ge.f32.partialorder %v179, %v640
    %v643 = vsel %vm641, -inf, %v178
    %v644 = vsel %vm642, -inf, %v179
    %v645 = vsel %vm641, 1, 0
    %v646 = vsel %vm642, 1, 0
    %v647 = vcvt.s32.f32 %v645
    %v648 = vcvt.s32.f32 %v646
    %v649 = vadd.f32 %v647, %v648
    %650 = vadd.xlane.f32.xlu0 %v649
    %v651 = vpop.xlane.xlu0 %650
    %vm652 = vcmp.ge.f32.partialorder %v651, 32.0
    %v653 = vsel %vm652, %v640, -inf
    %v654 = vmax.f32 %v637, %v653
    %v655 = vmax.f32 %v643, %v644
    %656 = vmax.xlane.f32.xlu0 %v655
    %v657 = vpop.xlane.xlu0 %656
    %vm658 = vcmp.ge.f32.partialorder %v178, %v657
    %vm659 = vcmp.ge.f32.partialorder %v179, %v657
    %v660 = vsel %vm658, -inf, %v178
    %v661 = vsel %vm659, -inf, %v179
    %v662 = vsel %vm658, 1, 0
    %v663 = vsel %vm659, 1, 0
    %v664 = vcvt.s32.f32 %v662
    %v665 = vcvt.s32.f32 %v663
    %v666 = vadd.f32 %v664, %v665
    %667 = vadd.xlane.f32.xlu0 %v666
    %v668 = vpop.xlane.xlu0 %667
    %vm669 = vcmp.ge.f32.partialorder %v668, 32.0
    %v670 = vsel %vm669, %v657, -inf
    %v671 = vmax.f32 %v654, %v670
    %v672 = vmax.f32 %v660, %v661
    %673 = vmax.xlane.f32.xlu0 %v672
    %v674 = vpop.xlane.xlu0 %673
    %vm675 = vcmp.ge.f32.partialorder %v178, %v674
    %vm676 = vcmp.ge.f32.partialorder %v179, %v674
    %v677 = vsel %vm675, -inf, %v178
    %v678 = vsel %vm676, -inf, %v179
    %v679 = vsel %vm675, 1, 0
    %v680 = vsel %vm676, 1, 0
    %v681 = vcvt.s32.f32 %v679
    %v682 = vcvt.s32.f32 %v680
    %v683 = vadd.f32 %v681, %v682
    %684 = vadd.xlane.f32.xlu0 %v683
    %v685 = vpop.xlane.xlu0 %684
    %vm686 = vcmp.ge.f32.partialorder %v685, 32.0
    %v687 = vsel %vm686, %v674, -inf
    %v688 = vmax.f32 %v671, %v687
    %v689 = vmax.f32 %v677, %v678
    %690 = vmax.xlane.f32.xlu0 %v689
    %v691 = vpop.xlane.xlu0 %690
    %vm692 = vcmp.ge.f32.partialorder %v178, %v691
    %vm693 = vcmp.ge.f32.partialorder %v179, %v691
    %v694 = vsel %vm692, -inf, %v178
    %v695 = vsel %vm693, -inf, %v179
    %v696 = vsel %vm692, 1, 0
    %v697 = vsel %vm693, 1, 0
    %v698 = vcvt.s32.f32 %v696
    %v699 = vcvt.s32.f32 %v697
    %v700 = vadd.f32 %v698, %v699
    %701 = vadd.xlane.f32.xlu0 %v700
    %v702 = vpop.xlane.xlu0 %701
    %vm703 = vcmp.ge.f32.partialorder %v702, 32.0
    %v704 = vsel %vm703, %v691, -inf
    %v705 = vmax.f32 %v688, %v704
    %v706 = vmax.f32 %v694, %v695
    %707 = vmax.xlane.f32.xlu0 %v706
    %v708 = vpop.xlane.xlu0 %707
    %vm709 = vcmp.ge.f32.partialorder %v178, %v708
    %vm710 = vcmp.ge.f32.partialorder %v179, %v708
    %v711 = vsel %vm709, 1, 0
    %v712 = vsel %vm710, 1, 0
    %v713 = vcvt.s32.f32 %v711
    %v714 = vcvt.s32.f32 %v712
    %v715 = vadd.f32 %v713, %v714
    %716 = vadd.xlane.f32.xlu0 %v715
    %v717 = vpop.xlane.xlu0 %716
    %vm718 = vcmp.ge.f32.partialorder %v717, 32.0
    %v719 = vsel %vm718, %v708, -inf
    %v720 = vmax.f32 %v705, %v719
    %vm721 = vcmp.ge.f32.partialorder %v178, %v720
    %vm722 = vcmp.ge.f32.partialorder %v179, %v720
    %v723 = vsel %vm721, %v178, 0.0
    %v724 = vsel %vm722, %v179, 0.0
    %v725 = vstv %s23
    %v726 = vmul.f32 %v725, %v100
    %v727 = vmul.f32 %v725, %v101
    %s728 = ssub.f32 1.0, %s23
    %v729 = vstv %s728
    %v730 = vmul.f32 %v729, %v723
    %v731 = vmul.f32 %v729, %v724
    %v732 = vadd.f32 %v726, %v730
    %v733 = vadd.f32 %v727, %v731
  $region22: #{ssma_forward.3} parent=0 // loop_footer
    %s97 = sadd.s32 1, %s93
  $region23: #{ssma_forward.3} parent=0 // loop_footer_branch
    %92 = sbr.rel target = $region19
  $region24: #{ssma_forward.3} parent=0 // loop_exit
    _
  %734 = vst [vmem:[#allocation2] sm:$0xff] %v98
  %735 = vst [vmem:[#allocation2 + $0x8] sm:$0xff] %v99
  %736 = vst [vmem:[#allocation3] sm:$0xff] %v100
  %737 = vst [vmem:[#allocation3 + $0x8] sm:$0xff] %v101
  // Predicated region
  $region25: #{ssma_forward.3} parent=0 // pred_check
    %p738 = pneg %p15
  $region26: #{ssma_forward.3} parent=0 // pred_check_branch
    %740 = sbr.rel (%p738) target = $region28
  $region27: #{ssma_forward.3} parent=0 // pred_region
    %741 = vst [vmem:[%s3] sm:$0xff] %v100
    %742 = vst [vmem:[%s3 + $0x8] sm:$0xff] %v101
  $region28: #{ssma_forward.3} parent=0 // pred_fallthru
    _
  // Predicated region
  $region29: #{ssma_forward.3} parent=0 // pred_check
    _
  $region30: #{ssma_forward.3} parent=0 // pred_check_branch
    %744 = sbr.rel (0) target = $region32
  $region31: #{ssma_forward.3} parent=0 // pred_region
    _
  $region32: #{ssma_forward.3} parent=0 // pred_fallthru
    _
  // Predicated region
  $region33: #{ssma_forward.3} parent=0 // pred_check
    _
  $region34: #{ssma_forward.3} parent=0 // pred_check_branch
    %746 = sbr.rel (0) target = $region36
  $region35: #{ssma_forward.3} parent=0 // pred_region
    _
  $region36: #{ssma_forward.3} parent=0 // pred_fallthru
    _

</llo_original>
